<compile_context>
chip_gen: v7x
topology: tpu7x:2x2x1
jax: 0.10.0
libtpu: 0.0.40
codegen_flags: <defaults>
</compile_context>

<pallas_src>
import functools

import jax
import jax.numpy as jnp
from jax import lax
from jax.experimental import pallas as pl
from jax.experimental.pallas import tpu as pltpu


def _round_up(x, m):
    return (x + m - 1) // m * m


def _conv_im2col_kernel(x_ref, w_ref, o_ref, *rest, H, W, Cin, KH, KW,
                        with_stats):
    """One batch tile: conv as a single im2col matmul (+ BN partial sums).

    x_ref : (B_TILE, H+KH-1, W+KW-1, Cin)  spatially pre-padded input tile
    w_ref : (KH*KW*Cin, Cout)              folded weights (resident block)
    o_ref : (B_TILE*H*W, Cout)             conv output rows (bf16 if bn)
    rest  : [stat_ref (2, Cout)]           only when with_stats
    """
    if with_stats:
        (stat_ref,) = rest

    b_tile = x_ref.shape[0]
    K = KH * KW * Cin

    # Register-resident im2col: concatenate the KH*KW shifted slices along the
    # channel axis (no VMEM scratch buffer, no narrow masked scratch stores).
    taps = []
    for kh in range(KH):
        for kw in range(KW):
            taps.append(x_ref[:, kh:kh + H, kw:kw + W, :])
    patches = jnp.concatenate(taps, axis=-1)                # (B, H, W, K)
    patches = patches.reshape(b_tile * H * W, K)            # (B*H*W, K)

    # Single MXU matmul for the whole batch tile, f32 accumulation.
    acc = jnp.dot(patches, w_ref[...],
                  preferred_element_type=jnp.float32)       # (B*H*W, Cout)
    o_ref[...] = acc.astype(o_ref.dtype)

    if with_stats:
        # Per-tile partial sums for training-mode BatchNorm batch statistics,
        # taken from the f32 accumulator (reduced across tiles in the wrapper).
        s1 = jnp.sum(acc, axis=0, keepdims=True)            # (1, Cout)
        s2 = jnp.sum(acc * acc, axis=0, keepdims=True)      # (1, Cout)
        stat_ref[...] = jnp.concatenate([s1, s2], axis=0)   # (2, Cout)


def _affine_kernel(h_ref, scale_ref, shift_ref, o_ref):
    # y = h * scale + shift, per output channel (minor/lane axis).  BN math
    # stays in f32 even when h was stored as bf16.
    h = h_ref[...].astype(jnp.float32)
    o_ref[...] = h * scale_ref[...] + shift_ref[...]


def _pick_batch_tile(n, requested, hw):
    bt = max(1, min(requested, n))
    # Keep >= 2 grid steps when possible so "parallel" semantics can place
    # work on both v7x TensorCores (harmless no-op on v5e/v6e).
    if n > 1 and pl.cdiv(n, bt) < 2:
        bt = pl.cdiv(n, 2)
    # Block second-minor dim (bt * H * W) must be 8-aligned unless it spans
    # the whole array; fall back to a single block otherwise.
    if (bt * hw) % 8 != 0:
        bt = n
    return bt


def conv_forward(x_nchw, weight_oihw, gamma=None, beta=None, eps=1e-5,
                 compute_dtype=jnp.float32, batch_tile=8,
                 bn_intermediate_dtype=jnp.bfloat16):
    """Pallas forward of the Conv module.  gamma/beta None <=> bn=False."""
    N, Cin, H, W = x_nchw.shape
    Cout, Cin_w, KH, KW = weight_oihw.shape
    assert Cin == Cin_w
    assert KH == KW, "padding = kernel_size // 2 assumes a square kernel"
    p = KH // 2
    Hp, Wp = H + 2 * p, W + 2 * p
    K = KH * KW * Cin
    use_bn = gamma is not None

    # --- batch tiling -------------------------------------------------------
    bt = _pick_batch_tile(N, batch_tile, H * W)
    n_pad = _round_up(N, bt)          # zero-padded images contribute 0 to BN
    grid_n = n_pad // bt
    m_blk = bt * H * W
    m_tot = n_pad * H * W

    # --- wrapper glue: layout + spatial halo padding + dtype cast -----------
    # TODO(synk): keep the model NHWC end-to-end and handle the k//2 halo with
    # in-kernel masking to remove this input-side HBM round trip.
    x_nhwc = jnp.transpose(x_nchw, (0, 2, 3, 1))
    x_pad = jnp.pad(x_nhwc, ((0, n_pad - N), (p, p), (p, p), (0, 0))).astype(
        compute_dtype)
    # OIHW -> (KH, KW, Cin, Cout) -> (KH*KW*Cin, Cout); no channel padding.
    w = jnp.transpose(weight_oihw, (2, 3, 1, 0)).reshape(K, Cout).astype(
        compute_dtype)

    h_dtype = bn_intermediate_dtype if use_bn else jnp.float32
    itemsize = jnp.dtype(compute_dtype).itemsize
    h_itemsize = jnp.dtype(h_dtype).itemsize
    cost = pl.CostEstimate(
        flops=2 * n_pad * H * W * K * Cout,
        transcendentals=0,
        bytes_accessed=(x_pad.size * itemsize + w.size * itemsize
                        + m_tot * Cout * h_itemsize
                        + (grid_n * 2 * Cout * 4 if use_bn else 0)))

    out_shapes = [jax.ShapeDtypeStruct((m_tot, Cout), h_dtype)]
    out_specs = [pl.BlockSpec((m_blk, Cout), lambda n: (n, 0))]
    if use_bn:
        out_shapes.append(jax.ShapeDtypeStruct((grid_n, 2, Cout), jnp.float32))
        out_specs.append(pl.BlockSpec((None, 2, Cout), lambda n: (n, 0, 0)))

    kernel = functools.partial(_conv_im2col_kernel, H=H, W=W, Cin=Cin,
                               KH=KH, KW=KW, with_stats=use_bn)

    conv_results = pl.pallas_call(
        kernel,
        out_shape=tuple(out_shapes),
        grid=(grid_n,),
        in_specs=[
            pl.BlockSpec((bt, Hp, Wp, Cin), lambda n: (n, 0, 0, 0)),
            pl.BlockSpec((K, Cout), lambda n: (0, 0)),   # resident weights
        ],
        out_specs=tuple(out_specs),
        compiler_params=pltpu.CompilerParams(
            dimension_semantics=("parallel",)),   # only matters on v7x (2 TC)
        cost_estimate=cost,
    )(x_pad, w)

    if use_bn:
        h, stats = conv_results
        # Tiny cross-tile reduction + scale/shift math in plain JAX (f32).
        # Zero-padded batch entries contribute exactly 0 to both sums.
        cnt = jnp.float32(N * H * W)
        sums = jnp.sum(stats[:, 0, :], axis=0)
        sumsq = jnp.sum(stats[:, 1, :], axis=0)
        mean = sums / cnt
        # NOTE: E[x^2]-E[x]^2 is cancellation-prone when |mean| >> std; fine
        # at AlphaZero activation scales (clamped >= 0, biased like torch BN).
        var = jnp.maximum(sumsq / cnt - mean * mean, 0.0)
        rstd = lax.rsqrt(var + eps)
        gamma_v = jnp.asarray(gamma, jnp.float32).reshape(Cout)
        beta_v = jnp.asarray(beta, jnp.float32).reshape(Cout)
        scale = (gamma_v * rstd).reshape(1, Cout)
        shift = (beta_v - mean * gamma_v * rstd).reshape(1, Cout)
        # TODO(synk): running_mean / running_var momentum updates of
        # nn.BatchNorm2d are not produced (training batch statistics only).

        y = pl.pallas_call(
            _affine_kernel,
            out_shape=jax.ShapeDtypeStruct((m_tot, Cout), jnp.float32),
            grid=(grid_n,),
            in_specs=[
                pl.BlockSpec((m_blk, Cout), lambda n: (n, 0)),
                pl.BlockSpec((1, Cout), lambda n: (0, 0)),
                pl.BlockSpec((1, Cout), lambda n: (0, 0)),
            ],
            out_specs=pl.BlockSpec((m_blk, Cout), lambda n: (n, 0)),
            compiler_params=pltpu.CompilerParams(
                dimension_semantics=("parallel",)),
        )(h, scale, shift)
    else:
        y = conv_results[0]

    # Epilogue over UNPADDED data only (16x less than v2's 128-lane slab).
    out_nhwc = y[:N * H * W].reshape(N, H, W, Cout)
    # TODO(synk): downstream AlphaZero blocks could consume NHWC directly and
    # skip this final (small) transpose back to NCHW.
    return jnp.transpose(out_nhwc, (0, 3, 1, 2))


def _reference(x_nchw, weight_oihw, gamma=None, beta=None, eps=1e-5):
    KH = weight_oihw.shape[2]
    p = KH // 2
    out = lax.conv_general_dilated(
        x_nchw, weight_oihw, window_strides=(1, 1),
        padding=[(p, p), (p, p)],
        dimension_numbers=("NCHW", "OIHW", "NCHW"))
    if gamma is not None:
        mean = out.mean(axis=(0, 2, 3), keepdims=True)
        var = out.var(axis=(0, 2, 3), keepdims=True)   # biased, like torch BN
        out = (out - mean) / jnp.sqrt(var + eps)
        out = out * gamma.reshape(1, -1, 1, 1) + beta.reshape(1, -1, 1, 1)
    return out


if __name__ == "__main__":
    # Small shapes consistent with Conv(filters0=4, filters1=8, kernel_size=3)
    N, Cin, H, W = 2, 4, 16, 16
    Cout, Ksz = 8, 3

    key = jax.random.PRNGKey(0)
    kx, kw, kx2 = jax.random.split(key, 3)
    x = jax.random.normal(kx, (N, Cin, H, W), jnp.float32)
    # Deterministic conv weight (Kaiming-like scale); Conv2d has bias=False.
    weight = jax.random.normal(kw, (Cout, Cin, Ksz, Ksz), jnp.float32) * (
        1.0 / jnp.sqrt(Cin * Ksz * Ksz))
    # BatchNorm2d default init: gamma=1, beta=0.
    gamma = jnp.ones((Cout,), jnp.float32)
    beta = jnp.zeros((Cout,), jnp.float32)

    # A) bn=False path (module default), f32 compute, tight tolerance.
    out_plain = jax.block_until_ready(conv_forward(x, weight))
    ref_plain = _reference(x, weight)
    assert out_plain.shape == (N, Cout, H, W)
    assert jnp.allclose(out_plain, ref_plain, atol=5e-4, rtol=5e-4), (
        float(jnp.max(jnp.abs(out_plain - ref_plain))))

    # B) bn=True (training-mode batch statistics), all-f32 path, tight tol.
    out_bn = jax.block_until_ready(
        conv_forward(x, weight, gamma, beta,
                     bn_intermediate_dtype=jnp.float32))
    ref_bn = _reference(x, weight, gamma, beta)
    assert jnp.allclose(out_bn, ref_bn, atol=5e-4, rtol=5e-4), (
        float(jnp.max(jnp.abs(out_bn - ref_bn))))

    # C) Larger batch to exercise batch tiling (B_TILE=8, grid=2), bf16 MXU
    #    inputs + bf16 conv intermediate, compared against a bf16-rounded-
    #    input reference.
    N2 = 16
    x2 = jax.random.normal(kx2, (N2, Cin, H, W), jnp.float32)
    x2_bf = x2.astype(jnp.bfloat16).astype(jnp.float32)
    w_bf = weight.astype(jnp.bfloat16).astype(jnp.float32)
    out_bf16 = jax.block_until_ready(
        conv_forward(x2, weight, gamma, beta, compute_dtype=jnp.bfloat16))
    ref_bf16 = _reference(x2_bf, w_bf, gamma, beta)
    assert out_bf16.shape == (N2, Cout, H, W)
    assert jnp.allclose(out_bf16, ref_bf16, atol=2e-2, rtol=2e-2), (
        float(jnp.max(jnp.abs(out_bf16 - ref_bf16))))

    print("KERNEL_OK")
</pallas_src>

<mosaic_0001>
module attributes {stable_mosaic.version = 11 : i64} {
  func.func @_conv_im2col_kernel(%arg0: i32, %arg1: memref<1x18x18x4xf32, #tpu.memory_space<vmem>>, %arg2: memref<36x8xf32, #tpu.memory_space<vmem>>, %arg3: memref<256x8xf32, #tpu.memory_space<vmem>>) attributes {dimension_semantics = [#tpu.dimension_semantics<parallel>], iteration_bounds = array<i64: 2>, scalar_prefetch = 0 : i64, scratch_operands = 0 : i64, tpu.core_type = #tpu.core_type<tc>, window_params = [{transform_indices = @transform_0, window_bounds = array<i64: 1, 18, 18, 4>}, {pipeline_mode = #tpu.pipeline_mode<synchronous>, transform_indices = @transform_1, window_bounds = array<i64: 36, 8>}, {transform_indices = @transform_2, window_bounds = array<i64: 256, 8>}]} {
    %c0 = arith.constant 0 : index
    %c0_0 = arith.constant 0 : index
    %c0_1 = arith.constant 0 : index
    %c0_2 = arith.constant 0 : index
    %0 = vector.load %arg1[%c0, %c0_0, %c0_1, %c0_2] : memref<1x18x18x4xf32, #tpu.memory_space<vmem>>, vector<1x16x16x4xf32>
    %c0_3 = arith.constant 0 : index
    %c0_4 = arith.constant 0 : index
    %c1 = arith.constant 1 : index
    %c0_5 = arith.constant 0 : index
    %1 = vector.load %arg1[%c0_3, %c0_4, %c1, %c0_5] : memref<1x18x18x4xf32, #tpu.memory_space<vmem>>, vector<1x16x16x4xf32>
    %c0_6 = arith.constant 0 : index
    %c0_7 = arith.constant 0 : index
    %c2 = arith.constant 2 : index
    %c0_8 = arith.constant 0 : index
    %2 = vector.load %arg1[%c0_6, %c0_7, %c2, %c0_8] : memref<1x18x18x4xf32, #tpu.memory_space<vmem>>, vector<1x16x16x4xf32>
    %c0_9 = arith.constant 0 : index
    %c1_10 = arith.constant 1 : index
    %c0_11 = arith.constant 0 : index
    %c0_12 = arith.constant 0 : index
    %3 = vector.load %arg1[%c0_9, %c1_10, %c0_11, %c0_12] : memref<1x18x18x4xf32, #tpu.memory_space<vmem>>, vector<1x16x16x4xf32>
    %c0_13 = arith.constant 0 : index
    %c1_14 = arith.constant 1 : index
    %c1_15 = arith.constant 1 : index
    %c0_16 = arith.constant 0 : index
    %4 = vector.load %arg1[%c0_13, %c1_14, %c1_15, %c0_16] : memref<1x18x18x4xf32, #tpu.memory_space<vmem>>, vector<1x16x16x4xf32>
    %c0_17 = arith.constant 0 : index
    %c1_18 = arith.constant 1 : index
    %c2_19 = arith.constant 2 : index
    %c0_20 = arith.constant 0 : index
    %5 = vector.load %arg1[%c0_17, %c1_18, %c2_19, %c0_20] : memref<1x18x18x4xf32, #tpu.memory_space<vmem>>, vector<1x16x16x4xf32>
    %c0_21 = arith.constant 0 : index
    %c2_22 = arith.constant 2 : index
    %c0_23 = arith.constant 0 : index
    %c0_24 = arith.constant 0 : index
    %6 = vector.load %arg1[%c0_21, %c2_22, %c0_23, %c0_24] : memref<1x18x18x4xf32, #tpu.memory_space<vmem>>, vector<1x16x16x4xf32>
    %c0_25 = arith.constant 0 : index
    %c2_26 = arith.constant 2 : index
    %c1_27 = arith.constant 1 : index
    %c0_28 = arith.constant 0 : index
    %7 = vector.load %arg1[%c0_25, %c2_26, %c1_27, %c0_28] : memref<1x18x18x4xf32, #tpu.memory_space<vmem>>, vector<1x16x16x4xf32>
    %c0_29 = arith.constant 0 : index
    %c2_30 = arith.constant 2 : index
    %c2_31 = arith.constant 2 : index
    %c0_32 = arith.constant 0 : index
    %8 = vector.load %arg1[%c0_29, %c2_30, %c2_31, %c0_32] : memref<1x18x18x4xf32, #tpu.memory_space<vmem>>, vector<1x16x16x4xf32>
    %9 = tpu.concatenate %0, %1, %2, %3, %4, %5, %6, %7, %8 in 3 : vector<1x16x16x4xf32>, vector<1x16x16x4xf32>, vector<1x16x16x4xf32>, vector<1x16x16x4xf32>, vector<1x16x16x4xf32>, vector<1x16x16x4xf32>, vector<1x16x16x4xf32>, vector<1x16x16x4xf32>, vector<1x16x16x4xf32> -> vector<1x16x16x36xf32>
    %10 = vector.shape_cast %9 : vector<1x16x16x36xf32> to vector<256x36xf32>
    %c0_33 = arith.constant 0 : index
    %c0_34 = arith.constant 0 : index
    %11 = vector.load %arg2[%c0_33, %c0_34] : memref<36x8xf32, #tpu.memory_space<vmem>>, vector<36x8xf32>
    %cst = arith.constant dense<0.000000e+00> : vector<256x8xf32>
    %12 = tpu.matmul %10, %11, %cst {dimension_numbers = #tpu.dot_dimension_numbers<[1], [0], [0], [1], [0, 0, 1, 1], [], []>} : vector<256x36xf32>, vector<36x8xf32>, vector<256x8xf32> -> vector<256x8xf32>
    %c0_35 = arith.constant 0 : index
    %c0_36 = arith.constant 0 : index
    %13 = vector.load %arg3[%c0_35, %c0_36] : memref<256x8xf32, #tpu.memory_space<vmem>>, vector<256x8xf32>
    tpu.vector_store %arg3[%c0_35, %c0_36], %12 {strides = array<i32>} : memref<256x8xf32, #tpu.memory_space<vmem>>, vector<256x8xf32>,
    return
  }
  func.func @transform_0(%arg0: i32) -> (i32, i32, i32, i32) {
    %c0_i32 = arith.constant 0 : i32
    %c0_i32_0 = arith.constant 0 : i32
    %c0_i32_1 = arith.constant 0 : i32
    %c0_i32_2 = arith.constant 0 : i32
    return %arg0, %c0_i32, %c0_i32_0, %c0_i32_1 : i32, i32, i32, i32
  }
  func.func @transform_1(%arg0: i32) -> (i32, i32) {
    %c0_i32 = arith.constant 0 : i32
    %c0_i32_0 = arith.constant 0 : i32
    %c0_i32_1 = arith.constant 0 : i32
    return %c0_i32, %c0_i32_0 : i32, i32
  }
  func.func @transform_2(%arg0: i32) -> (i32, i32) {
    %c0_i32 = arith.constant 0 : i32
    %c0_i32_0 = arith.constant 0 : i32
    return %arg0, %c0_i32 : i32, i32
  }
}

</mosaic_0001>

<llo_original>
// kernel: tpu_custom_call.1
$region0: #{tpu_custom_call.1}
  #allocation0 [shape = 'u32[]', space=smem, size = 0x4, offset = 0x4, fixed_abs, tag = 'smem constant byte address 0x4 - core index']
  #allocation1 [shape = 'u32[144,128]{1,0:T(1,128)}', space=vmem, size = 0x12000, scoped, tag = 'internal scratch']
  %s0 = inlined_call_operand.vmem [shape: f32[2,18,18,4], index: 0, kind: input, shape index: {}]
  %s1 = inlined_call_operand.vmem [shape: f32[36,8], index: 1, kind: input, shape index: {}]
  %s2 = inlined_call_operand.vmem [shape: f32[512,8], index: 2, kind: output, shape index: {}]
  %s3 = sld [smem:[#allocation0]]
  $region41: #{tpu_custom_call.1} parent=0
    _
  %s5 = ssub.s32 1, %s3
  %s6 = scalar_select 0, %s5, %s3
  loop: start=0, step=1, limit=4
  $region2: #{tpu_custom_call.1} parent=0 // loop_pre_header
    _
  $region3: #{tpu_custom_call.1} parent=0 // loop_header
    %s8 = sphi 0, %s12
    %p9 = scmp.ge.s32.totalorder %s8, 4
    %s18 = sphi 0, %s20
    %s21 = sphi 0, %s18
    %s22 = sphi 0, %s21
    %s38 = sphi 0, %s22
    %s42 = sphi 0, %s42
    %s44 = sphi 0, %s42
    %s45 = sphi 0, %s44
    %s59 = sphi 0, %s45
    %s65 = sphi 0, %s67
    %s68 = sphi 0, %s65
    %s69 = sphi 0, %s68
    %s85 = sphi 0, %s69
  $region4: #{tpu_custom_call.1} parent=0 // loop_header_branch
    %11 = sbr.rel (%p9) target = $region8
  $region5: #{tpu_custom_call.1} parent=0 // loop_body
    %s13 = ssub.s32 %s8, 1
    %s14 = ssub.s32 %s8, 2
    %s15 = sadd.s32 %s8, 1
    %s16 = ssub.s32 %s8, %s15
    %p17 = scmp.eq.s32.totalorder %s16, 0
    %s19 = sadd.s32 %s18, 1
    %s20 = scalar_select %p17, %s18, %s19
    %p23 = pneg %p17
    %p24 = scmp.eq.s32.totalorder %s8, 1
    %p25 = por %p23, %p24
    %p26 = scmp.ne.s32.totalorder %s18, %s21
    %p27 = scmp.eq.s32.totalorder %s8, 0
    %p28 = por %p26, %p27
    %p29 = scmp.ne.s32.totalorder %s18, %s21
    %p30 = scmp.eq.s32.totalorder %s13, 1
    %p31 = por %p29, %p30
    %p32 = scmp.ne.s32.totalorder %s21, %s22
    %p33 = scmp.eq.s32.totalorder %s13, 0
    %p34 = por %p32, %p33
    %p35 = scmp.ne.s32.totalorder %s21, %s22
    %p36 = scmp.eq.s32.totalorder %s14, 1
    %p37 = por %p35, %p36
    %p39 = scmp.ne.s32.totalorder %s22, %s38
    %p40 = scmp.eq.s32.totalorder %s14, 0
    %p41 = por %p39, %p40
    %s43 = sadd.s32 %s42, 1
    %p46 = scmp.eq.s32.totalorder %s8, 1
    %p47 = scmp.ne.s32.totalorder %s42, %s44
    %p48 = scmp.eq.s32.totalorder %s8, 0
    %p49 = por %p47, %p48
    %p50 = scmp.ne.s32.totalorder %s42, %s44
    %p51 = scmp.eq.s32.totalorder %s13, 1
    %p52 = por %p50, %p51
    %p53 = scmp.ne.s32.totalorder %s44, %s45
    %p54 = scmp.eq.s32.totalorder %s13, 0
    %p55 = por %p53, %p54
    %p56 = scmp.ne.s32.totalorder %s44, %s45
    %p57 = scmp.eq.s32.totalorder %s14, 1
    %p58 = por %p56, %p57
    %p60 = scmp.ne.s32.totalorder %s45, %s59
    %p61 = scmp.eq.s32.totalorder %s14, 0
    %p62 = por %p60, %p61
    %s63 = ssub.s32 %s8, %s15
    %p64 = scmp.eq.s32.totalorder %s63, 0
    %s66 = sadd.s32 %s65, 1
    %s67 = scalar_select %p64, %s65, %s66
    %p70 = pneg %p64
    %p71 = scmp.eq.s32.totalorder %s8, 1
    %p72 = por %p70, %p71
    %p73 = scmp.ne.s32.totalorder %s65, %s68
    %p74 = scmp.eq.s32.totalorder %s8, 0
    %p75 = por %p73, %p74
    %p76 = scmp.ne.s32.totalorder %s65, %s68
    %p77 = scmp.eq.s32.totalorder %s13, 1
    %p78 = por %p76, %p77
    %p79 = scmp.ne.s32.totalorder %s68, %s69
    %p80 = scmp.eq.s32.totalorder %s13, 0
    %p81 = por %p79, %p80
    %p82 = scmp.ne.s32.totalorder %s68, %s69
    %p83 = scmp.eq.s32.totalorder %s14, 1
    %p84 = por %p82, %p83
    %p86 = scmp.ne.s32.totalorder %s69, %s85
    %p87 = scmp.eq.s32.totalorder %s14, 0
    %p88 = por %p86, %p87
    %p89 = scmp.le.s32.totalorder 1, %s8
    %p90 = scmp.lt.s32.totalorder %s8, 3
    %p91 = pnand %p89, %p90
    %p92 = pneg %p91
    // Predicated region
    $region9: #{tpu_custom_call.1} parent=5 // pred_check
      _
    $region10: #{tpu_custom_call.1} parent=5 // pred_check_branch
      %94 = sbr.rel (%p91) target = $region12
    $region11: #{tpu_custom_call.1} parent=5 // pred_region
      %s95 = ssub.s32 %s8, 1
      // Predicated region
      $region13: #{tpu_custom_call.1} parent=11 // pred_check
        %p96 = pneg %p55
      $region14: #{tpu_custom_call.1} parent=11 // pred_check_branch
        %98 = sbr.rel (%p96) target = $region16
      $region15: #{tpu_custom_call.1} parent=11 // pred_region
        _
      $region16: #{tpu_custom_call.1} parent=11 // pred_fallthru
        _
    $region12: #{tpu_custom_call.1} parent=5 // pred_fallthru
      _
    %p99 = scmp.lt.s32.totalorder %s8, 2
    // Predicated region
    $region17: #{tpu_custom_call.1} parent=5 // pred_check
      %p100 = pneg %p99
    $region18: #{tpu_custom_call.1} parent=5 // pred_check_branch
      %102 = sbr.rel (%p100) target = $region20
    $region19: #{tpu_custom_call.1} parent=5 // pred_region
      // Predicated region
      $region21: #{tpu_custom_call.1} parent=19 // pred_check
        %p103 = pneg %p28
      $region22: #{tpu_custom_call.1} parent=19 // pred_check_branch
        %105 = sbr.rel (%p103) target = $region24
      $region23: #{tpu_custom_call.1} parent=19 // pred_region
        %p106 = scmp.lt.s32.totalorder %s8, 1
        %s107 = scalar_select %p106, %s8, 1
        %s108 = smul.addr %s107, 54
        %s109 = smul.addr %s108, 8
        %s110 = scalar_lea.vmem %s0, %s109
      $region24: #{tpu_custom_call.1} parent=19 // pred_fallthru
        _
    $region20: #{tpu_custom_call.1} parent=5 // pred_fallthru
      _
    %p111 = scmp.le.s32.totalorder 1, %s8
    %p112 = scmp.lt.s32.totalorder %s8, 3
    %p113 = pnand %p111, %p112
    %p114 = pneg %p113
    // Predicated region
    $region25: #{tpu_custom_call.1} parent=5 // pred_check
      _
    $region26: #{tpu_custom_call.1} parent=5 // pred_check_branch
      %116 = sbr.rel (%p113) target = $region28
    $region27: #{tpu_custom_call.1} parent=5 // pred_region
      %s117 = ssub.s32 %s8, 1
      %p118 = scmp.lt.s32.totalorder %s13, 1
      %s119 = scalar_select %p118, %s13, 1
      %s120 = smul.addr %s119, 54
      %s121 = smul.addr %s120, 8
      %s122 = scalar_lea.vmem %s0, %s121
      %p123 = pneg %p34
      %p124 = pneg %p31
      %p125 = pneg %p55
      %p126 = pneg %p52
      %p127 = pneg %p81
      %p128 = pneg %p78
      %s129 = smul.u32 32, %s13
      %p130 = scmp.lt.s32.totalorder %s129, 63
      %s131 = scalar_select %p130, %s129, 63
      %s132 = smul.addr %s131, 8
      %s133 = scalar_lea.vmem %s2, %s132
      %p134 = scmp.lt.s32.totalorder %s13, 1
      %s135 = scalar_select %p134, %s13, 1
      %s136 = smul.addr %s135, 54
      %s137 = smul.addr %s136, 8
      %s138 = scalar_lea.vmem %s0, %s137
      %s139 = smul.u32 32, %s13
      %p140 = scmp.lt.s32.totalorder %s139, 63
      %s141 = scalar_select %p140, %s139, 63
      %s142 = smul.addr %s141, 8
      %s143 = scalar_lea.vmem %s2, %s142
      %s144 = smul.u32 32, %s13
      %v145 = vld [vmem:[%s138] sm:$0xff]
      %v146 = vld [vmem:[%s138 + $0x8] sm:$0xff]
      %v147 = vld [vmem:[%s138 + $0x18] sm:$0xff]
      %v148 = vld [vmem:[%s138 + $0x20] sm:$0xff]
      %v149 = vld [vmem:[%s138 + $0x30] sm:$0xff]
      %v150 = vld [vmem:[%s138 + $0x38] sm:$0xff]
      %v151 = vld [vmem:[%s138 + $0x48] sm:$0xff]
      %v152 = vld [vmem:[%s138 + $0x50] sm:$0xff]
      %v153 = vld [vmem:[%s138 + $0x60] sm:$0xff]
      %v154 = vld [vmem:[%s138 + $0x68] sm:$0xff]
      %v155 = vld [vmem:[%s138 + $0x78] sm:$0xff]
      %v156 = vld [vmem:[%s138 + $0x80] sm:$0xff]
      %v157 = vld [vmem:[%s138 + $0x90] sm:$0xff]
      %v158 = vld [vmem:[%s138 + $0x98] sm:$0xff]
      %v159 = vld [vmem:[%s138 + $0xa8] sm:$0xff]
      %v160 = vld [vmem:[%s138 + $0xb0] sm:$0xff]
      %v161 = vld [vmem:[%s138 + $0xc0] sm:$0xff]
      %v162 = vld [vmem:[%s138 + $0xc8] sm:$0xff]
      %v163 = vld [vmem:[%s138 + $0xd8] sm:$0xff]
      %v164 = vld [vmem:[%s138 + $0xe0] sm:$0xff]
      %v165 = vld [vmem:[%s138 + $0xf0] sm:$0xff]
      %v166 = vld [vmem:[%s138 + $0xf8] sm:$0xff]
      %v167 = vld [vmem:[%s138 + $0x108] sm:$0xff]
      %v168 = vld [vmem:[%s138 + $0x110] sm:$0xff]
      %v169 = vld [vmem:[%s138 + $0x120] sm:$0xff]
      %v170 = vld [vmem:[%s138 + $0x128] sm:$0xff]
      %v171 = vld [vmem:[%s138 + $0x138] sm:$0xff]
      %v172 = vld [vmem:[%s138 + $0x140] sm:$0xff]
      %v173 = vld [vmem:[%s138 + $0x150] sm:$0xff]
      %v174 = vld [vmem:[%s138 + $0x158] sm:$0xff]
      %v175 = vld [vmem:[%s138 + $0x168] sm:$0xff]
      %v176 = vld [vmem:[%s138 + $0x170] sm:$0xff]
      %v177 = vld [vmem:[%s138 + $0x1] sm:$0xff]
      %v178 = vld [vmem:[%s138 + $0x9] sm:$0xff]
      %v179 = vld [vmem:[%s138 + $0x19] sm:$0xff]
      %v180 = vld [vmem:[%s138 + $0x21] sm:$0xff]
      %v181 = vld [vmem:[%s138 + $0x31] sm:$0xff]
      %v182 = vld [vmem:[%s138 + $0x39] sm:$0xff]
      %v183 = vld [vmem:[%s138 + $0x49] sm:$0xff]
      %v184 = vld [vmem:[%s138 + $0x51] sm:$0xff]
      %v185 = vld [vmem:[%s138 + $0x61] sm:$0xff]
      %v186 = vld [vmem:[%s138 + $0x69] sm:$0xff]
      %v187 = vld [vmem:[%s138 + $0x79] sm:$0xff]
      %v188 = vld [vmem:[%s138 + $0x81] sm:$0xff]
      %v189 = vld [vmem:[%s138 + $0x91] sm:$0xff]
      %v190 = vld [vmem:[%s138 + $0x99] sm:$0xff]
      %v191 = vld [vmem:[%s138 + $0xa9] sm:$0xff]
      %v192 = vld [vmem:[%s138 + $0xb1] sm:$0xff]
      %v193 = vld [vmem:[%s138 + $0xc1] sm:$0xff]
      %v194 = vld [vmem:[%s138 + $0xc9] sm:$0xff]
      %v195 = vld [vmem:[%s138 + $0xd9] sm:$0xff]
      %v196 = vld [vmem:[%s138 + $0xe1] sm:$0xff]
      %v197 = vld [vmem:[%s138 + $0xf1] sm:$0xff]
      %v198 = vld [vmem:[%s138 + $0xf9] sm:$0xff]
      %v199 = vld [vmem:[%s138 + $0x109] sm:$0xff]
      %v200 = vld [vmem:[%s138 + $0x111] sm:$0xff]
      %v201 = vld [vmem:[%s138 + $0x121] sm:$0xff]
      %v202 = vld [vmem:[%s138 + $0x129] sm:$0xff]
      %v203 = vld [vmem:[%s138 + $0x139] sm:$0xff]
      %v204 = vld [vmem:[%s138 + $0x141] sm:$0xff]
      %v205 = vld [vmem:[%s138 + $0x151] sm:$0xff]
      %v206 = vld [vmem:[%s138 + $0x159] sm:$0xff]
      %v207 = vld [vmem:[%s138 + $0x169] sm:$0xff]
      %v208 = vld [vmem:[%s138 + $0x171] sm:$0xff]
      %v209 = vld [vmem:[%s138 + $0x2] sm:$0xff]
      %v210 = vld [vmem:[%s138 + $0xa] sm:$0xff]
      %v211 = vld [vmem:[%s138 + $0x1a] sm:$0xff]
      %v212 = vld [vmem:[%s138 + $0x22] sm:$0xff]
      %v213 = vld [vmem:[%s138 + $0x32] sm:$0xff]
      %v214 = vld [vmem:[%s138 + $0x3a] sm:$0xff]
      %v215 = vld [vmem:[%s138 + $0x4a] sm:$0xff]
      %v216 = vld [vmem:[%s138 + $0x52] sm:$0xff]
      %v217 = vld [vmem:[%s138 + $0x62] sm:$0xff]
      %v218 = vld [vmem:[%s138 + $0x6a] sm:$0xff]
      %v219 = vld [vmem:[%s138 + $0x7a] sm:$0xff]
      %v220 = vld [vmem:[%s138 + $0x82] sm:$0xff]
      %v221 = vld [vmem:[%s138 + $0x92] sm:$0xff]
      %v222 = vld [vmem:[%s138 + $0x9a] sm:$0xff]
      %v223 = vld [vmem:[%s138 + $0xaa] sm:$0xff]
      %v224 = vld [vmem:[%s138 + $0xb2] sm:$0xff]
      %v225 = vld [vmem:[%s138 + $0xc2] sm:$0xff]
      %v226 = vld [vmem:[%s138 + $0xca] sm:$0xff]
      %v227 = vld [vmem:[%s138 + $0xda] sm:$0xff]
      %v228 = vld [vmem:[%s138 + $0xe2] sm:$0xff]
      %v229 = vld [vmem:[%s138 + $0xf2] sm:$0xff]
      %v230 = vld [vmem:[%s138 + $0xfa] sm:$0xff]
      %v231 = vld [vmem:[%s138 + $0x10a] sm:$0xff]
      %v232 = vld [vmem:[%s138 + $0x112] sm:$0xff]
      %v233 = vld [vmem:[%s138 + $0x122] sm:$0xff]
      %v234 = vld [vmem:[%s138 + $0x12a] sm:$0xff]
      %v235 = vld [vmem:[%s138 + $0x13a] sm:$0xff]
      %v236 = vld [vmem:[%s138 + $0x142] sm:$0xff]
      %v237 = vld [vmem:[%s138 + $0x152] sm:$0xff]
      %v238 = vld [vmem:[%s138 + $0x15a] sm:$0xff]
      %v239 = vld [vmem:[%s138 + $0x16a] sm:$0xff]
      %v240 = vld [vmem:[%s138 + $0x172] sm:$0xff]
      %s241 = scalar_lea.vmem %s138, 24
      %v242 = vld [vmem:[%s241] sm:$0xff]
      %v243 = vld [vmem:[%s241 + $0x8] sm:$0xff]
      %v244 = vld [vmem:[%s241 + $0x18] sm:$0xff]
      %v245 = vld [vmem:[%s241 + $0x20] sm:$0xff]
      %v246 = vld [vmem:[%s241 + $0x30] sm:$0xff]
      %v247 = vld [vmem:[%s241 + $0x38] sm:$0xff]
      %v248 = vld [vmem:[%s241 + $0x48] sm:$0xff]
      %v249 = vld [vmem:[%s241 + $0x50] sm:$0xff]
      %v250 = vld [vmem:[%s241 + $0x60] sm:$0xff]
      %v251 = vld [vmem:[%s241 + $0x68] sm:$0xff]
      %v252 = vld [vmem:[%s241 + $0x78] sm:$0xff]
      %v253 = vld [vmem:[%s241 + $0x80] sm:$0xff]
      %v254 = vld [vmem:[%s241 + $0x90] sm:$0xff]
      %v255 = vld [vmem:[%s241 + $0x98] sm:$0xff]
      %v256 = vld [vmem:[%s241 + $0xa8] sm:$0xff]
      %v257 = vld [vmem:[%s241 + $0xb0] sm:$0xff]
      %v258 = vld [vmem:[%s241 + $0xc0] sm:$0xff]
      %v259 = vld [vmem:[%s241 + $0xc8] sm:$0xff]
      %v260 = vld [vmem:[%s241 + $0xd8] sm:$0xff]
      %v261 = vld [vmem:[%s241 + $0xe0] sm:$0xff]
      %v262 = vld [vmem:[%s241 + $0xf0] sm:$0xff]
      %v263 = vld [vmem:[%s241 + $0xf8] sm:$0xff]
      %v264 = vld [vmem:[%s241 + $0x108] sm:$0xff]
      %v265 = vld [vmem:[%s241 + $0x110] sm:$0xff]
      %v266 = vld [vmem:[%s241 + $0x120] sm:$0xff]
      %v267 = vld [vmem:[%s241 + $0x128] sm:$0xff]
      %v268 = vld [vmem:[%s241 + $0x138] sm:$0xff]
      %v269 = vld [vmem:[%s241 + $0x140] sm:$0xff]
      %v270 = vld [vmem:[%s241 + $0x150] sm:$0xff]
      %v271 = vld [vmem:[%s241 + $0x158] sm:$0xff]
      %v272 = vld [vmem:[%s241 + $0x168] sm:$0xff]
      %v273 = vld [vmem:[%s241 + $0x170] sm:$0xff]
      %v274 = vld [vmem:[%s241 + $0x1] sm:$0xff]
      %v275 = vld [vmem:[%s241 + $0x9] sm:$0xff]
      %v276 = vld [vmem:[%s241 + $0x19] sm:$0xff]
      %v277 = vld [vmem:[%s241 + $0x21] sm:$0xff]
      %v278 = vld [vmem:[%s241 + $0x31] sm:$0xff]
      %v279 = vld [vmem:[%s241 + $0x39] sm:$0xff]
      %v280 = vld [vmem:[%s241 + $0x49] sm:$0xff]
      %v281 = vld [vmem:[%s241 + $0x51] sm:$0xff]
      %v282 = vld [vmem:[%s241 + $0x61] sm:$0xff]
      %v283 = vld [vmem:[%s241 + $0x69] sm:$0xff]
      %v284 = vld [vmem:[%s241 + $0x79] sm:$0xff]
      %v285 = vld [vmem:[%s241 + $0x81] sm:$0xff]
      %v286 = vld [vmem:[%s241 + $0x91] sm:$0xff]
      %v287 = vld [vmem:[%s241 + $0x99] sm:$0xff]
      %v288 = vld [vmem:[%s241 + $0xa9] sm:$0xff]
      %v289 = vld [vmem:[%s241 + $0xb1] sm:$0xff]
      %v290 = vld [vmem:[%s241 + $0xc1] sm:$0xff]
      %v291 = vld [vmem:[%s241 + $0xc9] sm:$0xff]
      %v292 = vld [vmem:[%s241 + $0xd9] sm:$0xff]
      %v293 = vld [vmem:[%s241 + $0xe1] sm:$0xff]
      %v294 = vld [vmem:[%s241 + $0xf1] sm:$0xff]
      %v295 = vld [vmem:[%s241 + $0xf9] sm:$0xff]
      %v296 = vld [vmem:[%s241 + $0x109] sm:$0xff]
      %v297 = vld [vmem:[%s241 + $0x111] sm:$0xff]
      %v298 = vld [vmem:[%s241 + $0x121] sm:$0xff]
      %v299 = vld [vmem:[%s241 + $0x129] sm:$0xff]
      %v300 = vld [vmem:[%s241 + $0x139] sm:$0xff]
      %v301 = vld [vmem:[%s241 + $0x141] sm:$0xff]
      %v302 = vld [vmem:[%s241 + $0x151] sm:$0xff]
      %v303 = vld [vmem:[%s241 + $0x159] sm:$0xff]
      %v304 = vld [vmem:[%s241 + $0x169] sm:$0xff]
      %v305 = vld [vmem:[%s241 + $0x171] sm:$0xff]
      %v306 = vld [vmem:[%s241 + $0x2] sm:$0xff]
      %v307 = vld [vmem:[%s241 + $0xa] sm:$0xff]
      %v308 = vld [vmem:[%s241 + $0x1a] sm:$0xff]
      %v309 = vld [vmem:[%s241 + $0x22] sm:$0xff]
      %v310 = vld [vmem:[%s241 + $0x32] sm:$0xff]
      %v311 = vld [vmem:[%s241 + $0x3a] sm:$0xff]
      %v312 = vld [vmem:[%s241 + $0x4a] sm:$0xff]
      %v313 = vld [vmem:[%s241 + $0x52] sm:$0xff]
      %v314 = vld [vmem:[%s241 + $0x62] sm:$0xff]
      %v315 = vld [vmem:[%s241 + $0x6a] sm:$0xff]
      %v316 = vld [vmem:[%s241 + $0x7a] sm:$0xff]
      %v317 = vld [vmem:[%s241 + $0x82] sm:$0xff]
      %v318 = vld [vmem:[%s241 + $0x92] sm:$0xff]
      %v319 = vld [vmem:[%s241 + $0x9a] sm:$0xff]
      %v320 = vld [vmem:[%s241 + $0xaa] sm:$0xff]
      %v321 = vld [vmem:[%s241 + $0xb2] sm:$0xff]
      %v322 = vld [vmem:[%s241 + $0xc2] sm:$0xff]
      %v323 = vld [vmem:[%s241 + $0xca] sm:$0xff]
      %v324 = vld [vmem:[%s241 + $0xda] sm:$0xff]
      %v325 = vld [vmem:[%s241 + $0xe2] sm:$0xff]
      %v326 = vld [vmem:[%s241 + $0xf2] sm:$0xff]
      %v327 = vld [vmem:[%s241 + $0xfa] sm:$0xff]
      %v328 = vld [vmem:[%s241 + $0x10a] sm:$0xff]
      %v329 = vld [vmem:[%s241 + $0x112] sm:$0xff]
      %v330 = vld [vmem:[%s241 + $0x122] sm:$0xff]
      %v331 = vld [vmem:[%s241 + $0x12a] sm:$0xff]
      %v332 = vld [vmem:[%s241 + $0x13a] sm:$0xff]
      %v333 = vld [vmem:[%s241 + $0x142] sm:$0xff]
      %v334 = vld [vmem:[%s241 + $0x152] sm:$0xff]
      %v335 = vld [vmem:[%s241 + $0x15a] sm:$0xff]
      %v336 = vld [vmem:[%s241 + $0x16a] sm:$0xff]
      %v337 = vld [vmem:[%s241 + $0x172] sm:$0xff]
      %s338 = scalar_lea.vmem %s138, 48
      %v339 = vld [vmem:[%s338] sm:$0xff]
      %v340 = vld [vmem:[%s338 + $0x8] sm:$0xff]
      %v341 = vld [vmem:[%s338 + $0x18] sm:$0xff]
      %v342 = vld [vmem:[%s338 + $0x20] sm:$0xff]
      %v343 = vld [vmem:[%s338 + $0x30] sm:$0xff]
      %v344 = vld [vmem:[%s338 + $0x38] sm:$0xff]
      %v345 = vld [vmem:[%s338 + $0x48] sm:$0xff]
      %v346 = vld [vmem:[%s338 + $0x50] sm:$0xff]
      %v347 = vld [vmem:[%s338 + $0x60] sm:$0xff]
      %v348 = vld [vmem:[%s338 + $0x68] sm:$0xff]
      %v349 = vld [vmem:[%s338 + $0x78] sm:$0xff]
      %v350 = vld [vmem:[%s338 + $0x80] sm:$0xff]
      %v351 = vld [vmem:[%s338 + $0x90] sm:$0xff]
      %v352 = vld [vmem:[%s338 + $0x98] sm:$0xff]
      %v353 = vld [vmem:[%s338 + $0xa8] sm:$0xff]
      %v354 = vld [vmem:[%s338 + $0xb0] sm:$0xff]
      %v355 = vld [vmem:[%s338 + $0xc0] sm:$0xff]
      %v356 = vld [vmem:[%s338 + $0xc8] sm:$0xff]
      %v357 = vld [vmem:[%s338 + $0xd8] sm:$0xff]
      %v358 = vld [vmem:[%s338 + $0xe0] sm:$0xff]
      %v359 = vld [vmem:[%s338 + $0xf0] sm:$0xff]
      %v360 = vld [vmem:[%s338 + $0xf8] sm:$0xff]
      %v361 = vld [vmem:[%s338 + $0x108] sm:$0xff]
      %v362 = vld [vmem:[%s338 + $0x110] sm:$0xff]
      %v363 = vld [vmem:[%s338 + $0x120] sm:$0xff]
      %v364 = vld [vmem:[%s338 + $0x128] sm:$0xff]
      %v365 = vld [vmem:[%s338 + $0x138] sm:$0xff]
      %v366 = vld [vmem:[%s338 + $0x140] sm:$0xff]
      %v367 = vld [vmem:[%s338 + $0x150] sm:$0xff]
      %v368 = vld [vmem:[%s338 + $0x158] sm:$0xff]
      %v369 = vld [vmem:[%s338 + $0x168] sm:$0xff]
      %v370 = vld [vmem:[%s338 + $0x170] sm:$0xff]
      %v371 = vld [vmem:[%s338 + $0x1] sm:$0xff]
      %v372 = vld [vmem:[%s338 + $0x9] sm:$0xff]
      %v373 = vld [vmem:[%s338 + $0x19] sm:$0xff]
      %v374 = vld [vmem:[%s338 + $0x21] sm:$0xff]
      %v375 = vld [vmem:[%s338 + $0x31] sm:$0xff]
      %v376 = vld [vmem:[%s338 + $0x39] sm:$0xff]
      %v377 = vld [vmem:[%s338 + $0x49] sm:$0xff]
      %v378 = vld [vmem:[%s338 + $0x51] sm:$0xff]
      %v379 = vld [vmem:[%s338 + $0x61] sm:$0xff]
      %v380 = vld [vmem:[%s338 + $0x69] sm:$0xff]
      %v381 = vld [vmem:[%s338 + $0x79] sm:$0xff]
      %v382 = vld [vmem:[%s338 + $0x81] sm:$0xff]
      %v383 = vld [vmem:[%s338 + $0x91] sm:$0xff]
      %v384 = vld [vmem:[%s338 + $0x99] sm:$0xff]
      %v385 = vld [vmem:[%s338 + $0xa9] sm:$0xff]
      %v386 = vld [vmem:[%s338 + $0xb1] sm:$0xff]
      %v387 = vld [vmem:[%s338 + $0xc1] sm:$0xff]
      %v388 = vld [vmem:[%s338 + $0xc9] sm:$0xff]
      %v389 = vld [vmem:[%s338 + $0xd9] sm:$0xff]
      %v390 = vld [vmem:[%s338 + $0xe1] sm:$0xff]
      %v391 = vld [vmem:[%s338 + $0xf1] sm:$0xff]
      %v392 = vld [vmem:[%s338 + $0xf9] sm:$0xff]
      %v393 = vld [vmem:[%s338 + $0x109] sm:$0xff]
      %v394 = vld [vmem:[%s338 + $0x111] sm:$0xff]
      %v395 = vld [vmem:[%s338 + $0x121] sm:$0xff]
      %v396 = vld [vmem:[%s338 + $0x129] sm:$0xff]
      %v397 = vld [vmem:[%s338 + $0x139] sm:$0xff]
      %v398 = vld [vmem:[%s338 + $0x141] sm:$0xff]
      %v399 = vld [vmem:[%s338 + $0x151] sm:$0xff]
      %v400 = vld [vmem:[%s338 + $0x159] sm:$0xff]
      %v401 = vld [vmem:[%s338 + $0x169] sm:$0xff]
      %v402 = vld [vmem:[%s338 + $0x171] sm:$0xff]
      %v403 = vld [vmem:[%s338 + $0x2] sm:$0xff]
      %v404 = vld [vmem:[%s338 + $0xa] sm:$0xff]
      %v405 = vld [vmem:[%s338 + $0x1a] sm:$0xff]
      %v406 = vld [vmem:[%s338 + $0x22] sm:$0xff]
      %v407 = vld [vmem:[%s338 + $0x32] sm:$0xff]
      %v408 = vld [vmem:[%s338 + $0x3a] sm:$0xff]
      %v409 = vld [vmem:[%s338 + $0x4a] sm:$0xff]
      %v410 = vld [vmem:[%s338 + $0x52] sm:$0xff]
      %v411 = vld [vmem:[%s338 + $0x62] sm:$0xff]
      %v412 = vld [vmem:[%s338 + $0x6a] sm:$0xff]
      %v413 = vld [vmem:[%s338 + $0x7a] sm:$0xff]
      %v414 = vld [vmem:[%s338 + $0x82] sm:$0xff]
      %v415 = vld [vmem:[%s338 + $0x92] sm:$0xff]
      %v416 = vld [vmem:[%s338 + $0x9a] sm:$0xff]
      %v417 = vld [vmem:[%s338 + $0xaa] sm:$0xff]
      %v418 = vld [vmem:[%s338 + $0xb2] sm:$0xff]
      %v419 = vld [vmem:[%s338 + $0xc2] sm:$0xff]
      %v420 = vld [vmem:[%s338 + $0xca] sm:$0xff]
      %v421 = vld [vmem:[%s338 + $0xda] sm:$0xff]
      %v422 = vld [vmem:[%s338 + $0xe2] sm:$0xff]
      %v423 = vld [vmem:[%s338 + $0xf2] sm:$0xff]
      %v424 = vld [vmem:[%s338 + $0xfa] sm:$0xff]
      %v425 = vld [vmem:[%s338 + $0x10a] sm:$0xff]
      %v426 = vld [vmem:[%s338 + $0x112] sm:$0xff]
      %v427 = vld [vmem:[%s338 + $0x122] sm:$0xff]
      %v428 = vld [vmem:[%s338 + $0x12a] sm:$0xff]
      %v429 = vld [vmem:[%s338 + $0x13a] sm:$0xff]
      %v430 = vld [vmem:[%s338 + $0x142] sm:$0xff]
      %v431 = vld [vmem:[%s338 + $0x152] sm:$0xff]
      %v432 = vld [vmem:[%s338 + $0x15a] sm:$0xff]
      %v433 = vld [vmem:[%s338 + $0x16a] sm:$0xff]
      %v434 = vld [vmem:[%s338 + $0x172] sm:$0xff]
      %467 = vrot.lane.b32.xlu0 %v177, 4
      %v468 = vpop.permute.xlu0 %467
      %469 = vrot.lane.b32.xlu0 %v178, 4
      %v470 = vpop.permute.xlu0 %469
      %471 = vrot.lane.b32.xlu0 %v179, 4
      %v472 = vpop.permute.xlu0 %471
      %473 = vrot.lane.b32.xlu0 %v180, 4
      %v474 = vpop.permute.xlu0 %473
      %475 = vrot.lane.b32.xlu0 %v181, 4
      %v476 = vpop.permute.xlu0 %475
      %477 = vrot.lane.b32.xlu0 %v182, 4
      %v478 = vpop.permute.xlu0 %477
      %479 = vrot.lane.b32.xlu0 %v183, 4
      %v480 = vpop.permute.xlu0 %479
      %481 = vrot.lane.b32.xlu0 %v184, 4
      %v482 = vpop.permute.xlu0 %481
      %483 = vrot.lane.b32.xlu0 %v185, 4
      %v484 = vpop.permute.xlu0 %483
      %485 = vrot.lane.b32.xlu0 %v186, 4
      %v486 = vpop.permute.xlu0 %485
      %487 = vrot.lane.b32.xlu0 %v187, 4
      %v488 = vpop.permute.xlu0 %487
      %489 = vrot.lane.b32.xlu0 %v188, 4
      %v490 = vpop.permute.xlu0 %489
      %491 = vrot.lane.b32.xlu0 %v189, 4
      %v492 = vpop.permute.xlu0 %491
      %493 = vrot.lane.b32.xlu0 %v190, 4
      %v494 = vpop.permute.xlu0 %493
      %495 = vrot.lane.b32.xlu0 %v191, 4
      %v496 = vpop.permute.xlu0 %495
      %497 = vrot.lane.b32.xlu0 %v192, 4
      %v498 = vpop.permute.xlu0 %497
      %499 = vrot.lane.b32.xlu0 %v193, 4
      %v500 = vpop.permute.xlu0 %499
      %501 = vrot.lane.b32.xlu0 %v194, 4
      %v502 = vpop.permute.xlu0 %501
      %503 = vrot.lane.b32.xlu0 %v195, 4
      %v504 = vpop.permute.xlu0 %503
      %505 = vrot.lane.b32.xlu0 %v196, 4
      %v506 = vpop.permute.xlu0 %505
      %507 = vrot.lane.b32.xlu0 %v197, 4
      %v508 = vpop.permute.xlu0 %507
      %509 = vrot.lane.b32.xlu0 %v198, 4
      %v510 = vpop.permute.xlu0 %509
      %511 = vrot.lane.b32.xlu0 %v199, 4
      %v512 = vpop.permute.xlu0 %511
      %513 = vrot.lane.b32.xlu0 %v200, 4
      %v514 = vpop.permute.xlu0 %513
      %515 = vrot.lane.b32.xlu0 %v201, 4
      %v516 = vpop.permute.xlu0 %515
      %517 = vrot.lane.b32.xlu0 %v202, 4
      %v518 = vpop.permute.xlu0 %517
      %519 = vrot.lane.b32.xlu0 %v203, 4
      %v520 = vpop.permute.xlu0 %519
      %521 = vrot.lane.b32.xlu0 %v204, 4
      %v522 = vpop.permute.xlu0 %521
      %523 = vrot.lane.b32.xlu0 %v205, 4
      %v524 = vpop.permute.xlu0 %523
      %525 = vrot.lane.b32.xlu0 %v206, 4
      %v526 = vpop.permute.xlu0 %525
      %527 = vrot.lane.b32.xlu0 %v207, 4
      %v528 = vpop.permute.xlu0 %527
      %529 = vrot.lane.b32.xlu0 %v208, 4
      %v530 = vpop.permute.xlu0 %529
      %595 = vrot.lane.b32.xlu0 %v209, 8
      %v596 = vpop.permute.xlu0 %595
      %597 = vrot.lane.b32.xlu0 %v210, 8
      %v598 = vpop.permute.xlu0 %597
      %599 = vrot.lane.b32.xlu0 %v211, 8
      %v600 = vpop.permute.xlu0 %599
      %601 = vrot.lane.b32.xlu0 %v212, 8
      %v602 = vpop.permute.xlu0 %601
      %603 = vrot.lane.b32.xlu0 %v213, 8
      %v604 = vpop.permute.xlu0 %603
      %605 = vrot.lane.b32.xlu0 %v214, 8
      %v606 = vpop.permute.xlu0 %605
      %607 = vrot.lane.b32.xlu0 %v215, 8
      %v608 = vpop.permute.xlu0 %607
      %609 = vrot.lane.b32.xlu0 %v216, 8
      %v610 = vpop.permute.xlu0 %609
      %611 = vrot.lane.b32.xlu0 %v217, 8
      %v612 = vpop.permute.xlu0 %611
      %613 = vrot.lane.b32.xlu0 %v218, 8
      %v614 = vpop.permute.xlu0 %613
      %615 = vrot.lane.b32.xlu0 %v219, 8
      %v616 = vpop.permute.xlu0 %615
      %617 = vrot.lane.b32.xlu0 %v220, 8
      %v618 = vpop.permute.xlu0 %617
      %619 = vrot.lane.b32.xlu0 %v221, 8
      %v620 = vpop.permute.xlu0 %619
      %621 = vrot.lane.b32.xlu0 %v222, 8
      %v622 = vpop.permute.xlu0 %621
      %623 = vrot.lane.b32.xlu0 %v223, 8
      %v624 = vpop.permute.xlu0 %623
      %625 = vrot.lane.b32.xlu0 %v224, 8
      %v626 = vpop.permute.xlu0 %625
      %627 = vrot.lane.b32.xlu0 %v225, 8
      %v628 = vpop.permute.xlu0 %627
      %629 = vrot.lane.b32.xlu0 %v226, 8
      %v630 = vpop.permute.xlu0 %629
      %631 = vrot.lane.b32.xlu0 %v227, 8
      %v632 = vpop.permute.xlu0 %631
      %633 = vrot.lane.b32.xlu0 %v228, 8
      %v634 = vpop.permute.xlu0 %633
      %635 = vrot.lane.b32.xlu0 %v229, 8
      %v636 = vpop.permute.xlu0 %635
      %637 = vrot.lane.b32.xlu0 %v230, 8
      %v638 = vpop.permute.xlu0 %637
      %639 = vrot.lane.b32.xlu0 %v231, 8
      %v640 = vpop.permute.xlu0 %639
      %641 = vrot.lane.b32.xlu0 %v232, 8
      %v642 = vpop.permute.xlu0 %641
      %643 = vrot.lane.b32.xlu0 %v233, 8
      %v644 = vpop.permute.xlu0 %643
      %645 = vrot.lane.b32.xlu0 %v234, 8
      %v646 = vpop.permute.xlu0 %645
      %647 = vrot.lane.b32.xlu0 %v235, 8
      %v648 = vpop.permute.xlu0 %647
      %649 = vrot.lane.b32.xlu0 %v236, 8
      %v650 = vpop.permute.xlu0 %649
      %651 = vrot.lane.b32.xlu0 %v237, 8
      %v652 = vpop.permute.xlu0 %651
      %653 = vrot.lane.b32.xlu0 %v238, 8
      %v654 = vpop.permute.xlu0 %653
      %655 = vrot.lane.b32.xlu0 %v239, 8
      %v656 = vpop.permute.xlu0 %655
      %657 = vrot.lane.b32.xlu0 %v240, 8
      %v658 = vpop.permute.xlu0 %657
      %723 = vrot.lane.b32.xlu0 %v242, 12
      %v724 = vpop.permute.xlu0 %723
      %725 = vrot.lane.b32.xlu0 %v243, 12
      %v726 = vpop.permute.xlu0 %725
      %727 = vrot.lane.b32.xlu0 %v244, 12
      %v728 = vpop.permute.xlu0 %727
      %729 = vrot.lane.b32.xlu0 %v245, 12
      %v730 = vpop.permute.xlu0 %729
      %731 = vrot.lane.b32.xlu0 %v246, 12
      %v732 = vpop.permute.xlu0 %731
      %733 = vrot.lane.b32.xlu0 %v247, 12
      %v734 = vpop.permute.xlu0 %733
      %735 = vrot.lane.b32.xlu0 %v248, 12
      %v736 = vpop.permute.xlu0 %735
      %737 = vrot.lane.b32.xlu0 %v249, 12
      %v738 = vpop.permute.xlu0 %737
      %739 = vrot.lane.b32.xlu0 %v250, 12
      %v740 = vpop.permute.xlu0 %739
      %741 = vrot.lane.b32.xlu0 %v251, 12
      %v742 = vpop.permute.xlu0 %741
      %743 = vrot.lane.b32.xlu0 %v252, 12
      %v744 = vpop.permute.xlu0 %743
      %745 = vrot.lane.b32.xlu0 %v253, 12
      %v746 = vpop.permute.xlu0 %745
      %747 = vrot.lane.b32.xlu0 %v254, 12
      %v748 = vpop.permute.xlu0 %747
      %749 = vrot.lane.b32.xlu0 %v255, 12
      %v750 = vpop.permute.xlu0 %749
      %751 = vrot.lane.b32.xlu0 %v256, 12
      %v752 = vpop.permute.xlu0 %751
      %753 = vrot.lane.b32.xlu0 %v257, 12
      %v754 = vpop.permute.xlu0 %753
      %755 = vrot.lane.b32.xlu0 %v258, 12
      %v756 = vpop.permute.xlu0 %755
      %757 = vrot.lane.b32.xlu0 %v259, 12
      %v758 = vpop.permute.xlu0 %757
      %759 = vrot.lane.b32.xlu0 %v260, 12
      %v760 = vpop.permute.xlu0 %759
      %761 = vrot.lane.b32.xlu0 %v261, 12
      %v762 = vpop.permute.xlu0 %761
      %763 = vrot.lane.b32.xlu0 %v262, 12
      %v764 = vpop.permute.xlu0 %763
      %765 = vrot.lane.b32.xlu0 %v263, 12
      %v766 = vpop.permute.xlu0 %765
      %767 = vrot.lane.b32.xlu0 %v264, 12
      %v768 = vpop.permute.xlu0 %767
      %769 = vrot.lane.b32.xlu0 %v265, 12
      %v770 = vpop.permute.xlu0 %769
      %771 = vrot.lane.b32.xlu0 %v266, 12
      %v772 = vpop.permute.xlu0 %771
      %773 = vrot.lane.b32.xlu0 %v267, 12
      %v774 = vpop.permute.xlu0 %773
      %775 = vrot.lane.b32.xlu0 %v268, 12
      %v776 = vpop.permute.xlu0 %775
      %777 = vrot.lane.b32.xlu0 %v269, 12
      %v778 = vpop.permute.xlu0 %777
      %779 = vrot.lane.b32.xlu0 %v270, 12
      %v780 = vpop.permute.xlu0 %779
      %781 = vrot.lane.b32.xlu0 %v271, 12
      %v782 = vpop.permute.xlu0 %781
      %783 = vrot.lane.b32.xlu0 %v272, 12
      %v784 = vpop.permute.xlu0 %783
      %785 = vrot.lane.b32.xlu0 %v273, 12
      %v786 = vpop.permute.xlu0 %785
      %851 = vrot.lane.b32.xlu0 %v274, 16
      %v852 = vpop.permute.xlu0 %851
      %853 = vrot.lane.b32.xlu0 %v275, 16
      %v854 = vpop.permute.xlu0 %853
      %855 = vrot.lane.b32.xlu0 %v276, 16
      %v856 = vpop.permute.xlu0 %855
      %857 = vrot.lane.b32.xlu0 %v277, 16
      %v858 = vpop.permute.xlu0 %857
      %859 = vrot.lane.b32.xlu0 %v278, 16
      %v860 = vpop.permute.xlu0 %859
      %861 = vrot.lane.b32.xlu0 %v279, 16
      %v862 = vpop.permute.xlu0 %861
      %863 = vrot.lane.b32.xlu0 %v280, 16
      %v864 = vpop.permute.xlu0 %863
      %865 = vrot.lane.b32.xlu0 %v281, 16
      %v866 = vpop.permute.xlu0 %865
      %867 = vrot.lane.b32.xlu0 %v282, 16
      %v868 = vpop.permute.xlu0 %867
      %869 = vrot.lane.b32.xlu0 %v283, 16
      %v870 = vpop.permute.xlu0 %869
      %871 = vrot.lane.b32.xlu0 %v284, 16
      %v872 = vpop.permute.xlu0 %871
      %873 = vrot.lane.b32.xlu0 %v285, 16
      %v874 = vpop.permute.xlu0 %873
      %875 = vrot.lane.b32.xlu0 %v286, 16
      %v876 = vpop.permute.xlu0 %875
      %877 = vrot.lane.b32.xlu0 %v287, 16
      %v878 = vpop.permute.xlu0 %877
      %879 = vrot.lane.b32.xlu0 %v288, 16
      %v880 = vpop.permute.xlu0 %879
      %881 = vrot.lane.b32.xlu0 %v289, 16
      %v882 = vpop.permute.xlu0 %881
      %883 = vrot.lane.b32.xlu0 %v290, 16
      %v884 = vpop.permute.xlu0 %883
      %885 = vrot.lane.b32.xlu0 %v291, 16
      %v886 = vpop.permute.xlu0 %885
      %887 = vrot.lane.b32.xlu0 %v292, 16
      %v888 = vpop.permute.xlu0 %887
      %889 = vrot.lane.b32.xlu0 %v293, 16
      %v890 = vpop.permute.xlu0 %889
      %891 = vrot.lane.b32.xlu0 %v294, 16
      %v892 = vpop.permute.xlu0 %891
      %893 = vrot.lane.b32.xlu0 %v295, 16
      %v894 = vpop.permute.xlu0 %893
      %895 = vrot.lane.b32.xlu0 %v296, 16
      %v896 = vpop.permute.xlu0 %895
      %897 = vrot.lane.b32.xlu0 %v297, 16
      %v898 = vpop.permute.xlu0 %897
      %899 = vrot.lane.b32.xlu0 %v298, 16
      %v900 = vpop.permute.xlu0 %899
      %901 = vrot.lane.b32.xlu0 %v299, 16
      %v902 = vpop.permute.xlu0 %901
      %903 = vrot.lane.b32.xlu0 %v300, 16
      %v904 = vpop.permute.xlu0 %903
      %905 = vrot.lane.b32.xlu0 %v301, 16
      %v906 = vpop.permute.xlu0 %905
      %907 = vrot.lane.b32.xlu0 %v302, 16
      %v908 = vpop.permute.xlu0 %907
      %909 = vrot.lane.b32.xlu0 %v303, 16
      %v910 = vpop.permute.xlu0 %909
      %911 = vrot.lane.b32.xlu0 %v304, 16
      %v912 = vpop.permute.xlu0 %911
      %913 = vrot.lane.b32.xlu0 %v305, 16
      %v914 = vpop.permute.xlu0 %913
      %979 = vrot.lane.b32.xlu0 %v306, 20
      %v980 = vpop.permute.xlu0 %979
      %981 = vrot.lane.b32.xlu0 %v307, 20
      %v982 = vpop.permute.xlu0 %981
      %983 = vrot.lane.b32.xlu0 %v308, 20
      %v984 = vpop.permute.xlu0 %983
      %985 = vrot.lane.b32.xlu0 %v309, 20
      %v986 = vpop.permute.xlu0 %985
      %987 = vrot.lane.b32.xlu0 %v310, 20
      %v988 = vpop.permute.xlu0 %987
      %989 = vrot.lane.b32.xlu0 %v311, 20
      %v990 = vpop.permute.xlu0 %989
      %991 = vrot.lane.b32.xlu0 %v312, 20
      %v992 = vpop.permute.xlu0 %991
      %993 = vrot.lane.b32.xlu0 %v313, 20
      %v994 = vpop.permute.xlu0 %993
      %995 = vrot.lane.b32.xlu0 %v314, 20
      %v996 = vpop.permute.xlu0 %995
      %997 = vrot.lane.b32.xlu0 %v315, 20
      %v998 = vpop.permute.xlu0 %997
      %999 = vrot.lane.b32.xlu0 %v316, 20
      %v1000 = vpop.permute.xlu0 %999
      %1001 = vrot.lane.b32.xlu0 %v317, 20
      %v1002 = vpop.permute.xlu0 %1001
      %1003 = vrot.lane.b32.xlu0 %v318, 20
      %v1004 = vpop.permute.xlu0 %1003
      %1005 = vrot.lane.b32.xlu0 %v319, 20
      %v1006 = vpop.permute.xlu0 %1005
      %1007 = vrot.lane.b32.xlu0 %v320, 20
      %v1008 = vpop.permute.xlu0 %1007
      %1009 = vrot.lane.b32.xlu0 %v321, 20
      %v1010 = vpop.permute.xlu0 %1009
      %1011 = vrot.lane.b32.xlu0 %v322, 20
      %v1012 = vpop.permute.xlu0 %1011
      %1013 = vrot.lane.b32.xlu0 %v323, 20
      %v1014 = vpop.permute.xlu0 %1013
      %1015 = vrot.lane.b32.xlu0 %v324, 20
      %v1016 = vpop.permute.xlu0 %1015
      %1017 = vrot.lane.b32.xlu0 %v325, 20
      %v1018 = vpop.permute.xlu0 %1017
      %1019 = vrot.lane.b32.xlu0 %v326, 20
      %v1020 = vpop.permute.xlu0 %1019
      %1021 = vrot.lane.b32.xlu0 %v327, 20
      %v1022 = vpop.permute.xlu0 %1021
      %1023 = vrot.lane.b32.xlu0 %v328, 20
      %v1024 = vpop.permute.xlu0 %1023
      %1025 = vrot.lane.b32.xlu0 %v329, 20
      %v1026 = vpop.permute.xlu0 %1025
      %1027 = vrot.lane.b32.xlu0 %v330, 20
      %v1028 = vpop.permute.xlu0 %1027
      %1029 = vrot.lane.b32.xlu0 %v331, 20
      %v1030 = vpop.permute.xlu0 %1029
      %1031 = vrot.lane.b32.xlu0 %v332, 20
      %v1032 = vpop.permute.xlu0 %1031
      %1033 = vrot.lane.b32.xlu0 %v333, 20
      %v1034 = vpop.permute.xlu0 %1033
      %1035 = vrot.lane.b32.xlu0 %v334, 20
      %v1036 = vpop.permute.xlu0 %1035
      %1037 = vrot.lane.b32.xlu0 %v335, 20
      %v1038 = vpop.permute.xlu0 %1037
      %1039 = vrot.lane.b32.xlu0 %v336, 20
      %v1040 = vpop.permute.xlu0 %1039
      %1041 = vrot.lane.b32.xlu0 %v337, 20
      %v1042 = vpop.permute.xlu0 %1041
      %1107 = vrot.lane.b32.xlu0 %v339, 24
      %v1108 = vpop.permute.xlu0 %1107
      %1109 = vrot.lane.b32.xlu0 %v340, 24
      %v1110 = vpop.permute.xlu0 %1109
      %1111 = vrot.lane.b32.xlu0 %v341, 24
      %v1112 = vpop.permute.xlu0 %1111
      %1113 = vrot.lane.b32.xlu0 %v342, 24
      %v1114 = vpop.permute.xlu0 %1113
      %1115 = vrot.lane.b32.xlu0 %v343, 24
      %v1116 = vpop.permute.xlu0 %1115
      %1117 = vrot.lane.b32.xlu0 %v344, 24
      %v1118 = vpop.permute.xlu0 %1117
      %1119 = vrot.lane.b32.xlu0 %v345, 24
      %v1120 = vpop.permute.xlu0 %1119
      %1121 = vrot.lane.b32.xlu0 %v346, 24
      %v1122 = vpop.permute.xlu0 %1121
      %1123 = vrot.lane.b32.xlu0 %v347, 24
      %v1124 = vpop.permute.xlu0 %1123
      %1125 = vrot.lane.b32.xlu0 %v348, 24
      %v1126 = vpop.permute.xlu0 %1125
      %1127 = vrot.lane.b32.xlu0 %v349, 24
      %v1128 = vpop.permute.xlu0 %1127
      %1129 = vrot.lane.b32.xlu0 %v350, 24
      %v1130 = vpop.permute.xlu0 %1129
      %1131 = vrot.lane.b32.xlu0 %v351, 24
      %v1132 = vpop.permute.xlu0 %1131
      %1133 = vrot.lane.b32.xlu0 %v352, 24
      %v1134 = vpop.permute.xlu0 %1133
      %1135 = vrot.lane.b32.xlu0 %v353, 24
      %v1136 = vpop.permute.xlu0 %1135
      %1137 = vrot.lane.b32.xlu0 %v354, 24
      %v1138 = vpop.permute.xlu0 %1137
      %1139 = vrot.lane.b32.xlu0 %v355, 24
      %v1140 = vpop.permute.xlu0 %1139
      %1141 = vrot.lane.b32.xlu0 %v356, 24
      %v1142 = vpop.permute.xlu0 %1141
      %1143 = vrot.lane.b32.xlu0 %v357, 24
      %v1144 = vpop.permute.xlu0 %1143
      %1145 = vrot.lane.b32.xlu0 %v358, 24
      %v1146 = vpop.permute.xlu0 %1145
      %1147 = vrot.lane.b32.xlu0 %v359, 24
      %v1148 = vpop.permute.xlu0 %1147
      %1149 = vrot.lane.b32.xlu0 %v360, 24
      %v1150 = vpop.permute.xlu0 %1149
      %1151 = vrot.lane.b32.xlu0 %v361, 24
      %v1152 = vpop.permute.xlu0 %1151
      %1153 = vrot.lane.b32.xlu0 %v362, 24
      %v1154 = vpop.permute.xlu0 %1153
      %1155 = vrot.lane.b32.xlu0 %v363, 24
      %v1156 = vpop.permute.xlu0 %1155
      %1157 = vrot.lane.b32.xlu0 %v364, 24
      %v1158 = vpop.permute.xlu0 %1157
      %1159 = vrot.lane.b32.xlu0 %v365, 24
      %v1160 = vpop.permute.xlu0 %1159
      %1161 = vrot.lane.b32.xlu0 %v366, 24
      %v1162 = vpop.permute.xlu0 %1161
      %1163 = vrot.lane.b32.xlu0 %v367, 24
      %v1164 = vpop.permute.xlu0 %1163
      %1165 = vrot.lane.b32.xlu0 %v368, 24
      %v1166 = vpop.permute.xlu0 %1165
      %1167 = vrot.lane.b32.xlu0 %v369, 24
      %v1168 = vpop.permute.xlu0 %1167
      %1169 = vrot.lane.b32.xlu0 %v370, 24
      %v1170 = vpop.permute.xlu0 %1169
      %1235 = vrot.lane.b32.xlu0 %v371, 28
      %v1236 = vpop.permute.xlu0 %1235
      %1237 = vrot.lane.b32.xlu0 %v372, 28
      %v1238 = vpop.permute.xlu0 %1237
      %1239 = vrot.lane.b32.xlu0 %v373, 28
      %v1240 = vpop.permute.xlu0 %1239
      %1241 = vrot.lane.b32.xlu0 %v374, 28
      %v1242 = vpop.permute.xlu0 %1241
      %1243 = vrot.lane.b32.xlu0 %v375, 28
      %v1244 = vpop.permute.xlu0 %1243
      %1245 = vrot.lane.b32.xlu0 %v376, 28
      %v1246 = vpop.permute.xlu0 %1245
      %1247 = vrot.lane.b32.xlu0 %v377, 28
      %v1248 = vpop.permute.xlu0 %1247
      %1249 = vrot.lane.b32.xlu0 %v378, 28
      %v1250 = vpop.permute.xlu0 %1249
      %1251 = vrot.lane.b32.xlu0 %v379, 28
      %v1252 = vpop.permute.xlu0 %1251
      %1253 = vrot.lane.b32.xlu0 %v380, 28
      %v1254 = vpop.permute.xlu0 %1253
      %1255 = vrot.lane.b32.xlu0 %v381, 28
      %v1256 = vpop.permute.xlu0 %1255
      %1257 = vrot.lane.b32.xlu0 %v382, 28
      %v1258 = vpop.permute.xlu0 %1257
      %1259 = vrot.lane.b32.xlu0 %v383, 28
      %v1260 = vpop.permute.xlu0 %1259
      %1261 = vrot.lane.b32.xlu0 %v384, 28
      %v1262 = vpop.permute.xlu0 %1261
      %1263 = vrot.lane.b32.xlu0 %v385, 28
      %v1264 = vpop.permute.xlu0 %1263
      %1265 = vrot.lane.b32.xlu0 %v386, 28
      %v1266 = vpop.permute.xlu0 %1265
      %1267 = vrot.lane.b32.xlu0 %v387, 28
      %v1268 = vpop.permute.xlu0 %1267
      %1269 = vrot.lane.b32.xlu0 %v388, 28
      %v1270 = vpop.permute.xlu0 %1269
      %1271 = vrot.lane.b32.xlu0 %v389, 28
      %v1272 = vpop.permute.xlu0 %1271
      %1273 = vrot.lane.b32.xlu0 %v390, 28
      %v1274 = vpop.permute.xlu0 %1273
      %1275 = vrot.lane.b32.xlu0 %v391, 28
      %v1276 = vpop.permute.xlu0 %1275
      %1277 = vrot.lane.b32.xlu0 %v392, 28
      %v1278 = vpop.permute.xlu0 %1277
      %1279 = vrot.lane.b32.xlu0 %v393, 28
      %v1280 = vpop.permute.xlu0 %1279
      %1281 = vrot.lane.b32.xlu0 %v394, 28
      %v1282 = vpop.permute.xlu0 %1281
      %1283 = vrot.lane.b32.xlu0 %v395, 28
      %v1284 = vpop.permute.xlu0 %1283
      %1285 = vrot.lane.b32.xlu0 %v396, 28
      %v1286 = vpop.permute.xlu0 %1285
      %1287 = vrot.lane.b32.xlu0 %v397, 28
      %v1288 = vpop.permute.xlu0 %1287
      %1289 = vrot.lane.b32.xlu0 %v398, 28
      %v1290 = vpop.permute.xlu0 %1289
      %1291 = vrot.lane.b32.xlu0 %v399, 28
      %v1292 = vpop.permute.xlu0 %1291
      %1293 = vrot.lane.b32.xlu0 %v400, 28
      %v1294 = vpop.permute.xlu0 %1293
      %1295 = vrot.lane.b32.xlu0 %v401, 28
      %v1296 = vpop.permute.xlu0 %1295
      %1297 = vrot.lane.b32.xlu0 %v402, 28
      %v1298 = vpop.permute.xlu0 %1297
      %1363 = vrot.lane.b32.xlu0 %v403, 32
      %v1364 = vpop.permute.xlu0 %1363
      %1365 = vrot.lane.b32.xlu0 %v404, 32
      %v1366 = vpop.permute.xlu0 %1365
      %1367 = vrot.lane.b32.xlu0 %v405, 32
      %v1368 = vpop.permute.xlu0 %1367
      %1369 = vrot.lane.b32.xlu0 %v406, 32
      %v1370 = vpop.permute.xlu0 %1369
      %1371 = vrot.lane.b32.xlu0 %v407, 32
      %v1372 = vpop.permute.xlu0 %1371
      %1373 = vrot.lane.b32.xlu0 %v408, 32
      %v1374 = vpop.permute.xlu0 %1373
      %1375 = vrot.lane.b32.xlu0 %v409, 32
      %v1376 = vpop.permute.xlu0 %1375
      %1377 = vrot.lane.b32.xlu0 %v410, 32
      %v1378 = vpop.permute.xlu0 %1377
      %1379 = vrot.lane.b32.xlu0 %v411, 32
      %v1380 = vpop.permute.xlu0 %1379
      %1381 = vrot.lane.b32.xlu0 %v412, 32
      %v1382 = vpop.permute.xlu0 %1381
      %1383 = vrot.lane.b32.xlu0 %v413, 32
      %v1384 = vpop.permute.xlu0 %1383
      %1385 = vrot.lane.b32.xlu0 %v414, 32
      %v1386 = vpop.permute.xlu0 %1385
      %1387 = vrot.lane.b32.xlu0 %v415, 32
      %v1388 = vpop.permute.xlu0 %1387
      %1389 = vrot.lane.b32.xlu0 %v416, 32
      %v1390 = vpop.permute.xlu0 %1389
      %1391 = vrot.lane.b32.xlu0 %v417, 32
      %v1392 = vpop.permute.xlu0 %1391
      %1393 = vrot.lane.b32.xlu0 %v418, 32
      %v1394 = vpop.permute.xlu0 %1393
      %1395 = vrot.lane.b32.xlu0 %v419, 32
      %v1396 = vpop.permute.xlu0 %1395
      %1397 = vrot.lane.b32.xlu0 %v420, 32
      %v1398 = vpop.permute.xlu0 %1397
      %1399 = vrot.lane.b32.xlu0 %v421, 32
      %v1400 = vpop.permute.xlu0 %1399
      %1401 = vrot.lane.b32.xlu0 %v422, 32
      %v1402 = vpop.permute.xlu0 %1401
      %1403 = vrot.lane.b32.xlu0 %v423, 32
      %v1404 = vpop.permute.xlu0 %1403
      %1405 = vrot.lane.b32.xlu0 %v424, 32
      %v1406 = vpop.permute.xlu0 %1405
      %1407 = vrot.lane.b32.xlu0 %v425, 32
      %v1408 = vpop.permute.xlu0 %1407
      %1409 = vrot.lane.b32.xlu0 %v426, 32
      %v1410 = vpop.permute.xlu0 %1409
      %1411 = vrot.lane.b32.xlu0 %v427, 32
      %v1412 = vpop.permute.xlu0 %1411
      %1413 = vrot.lane.b32.xlu0 %v428, 32
      %v1414 = vpop.permute.xlu0 %1413
      %1415 = vrot.lane.b32.xlu0 %v429, 32
      %v1416 = vpop.permute.xlu0 %1415
      %1417 = vrot.lane.b32.xlu0 %v430, 32
      %v1418 = vpop.permute.xlu0 %1417
      %1419 = vrot.lane.b32.xlu0 %v431, 32
      %v1420 = vpop.permute.xlu0 %1419
      %1421 = vrot.lane.b32.xlu0 %v432, 32
      %v1422 = vpop.permute.xlu0 %1421
      %1423 = vrot.lane.b32.xlu0 %v433, 32
      %v1424 = vpop.permute.xlu0 %1423
      %1425 = vrot.lane.b32.xlu0 %v434, 32
      %v1426 = vpop.permute.xlu0 %1425
      %vm1459 = vcmask 31744
      %v1460 = vsel %vm1459, %v145, %v468
      %v1461 = vsel %vm1459, %v146, %v470
      %v1462 = vsel %vm1459, %v147, %v472
      %v1463 = vsel %vm1459, %v148, %v474
      %v1464 = vsel %vm1459, %v149, %v476
      %v1465 = vsel %vm1459, %v150, %v478
      %v1466 = vsel %vm1459, %v151, %v480
      %v1467 = vsel %vm1459, %v152, %v482
      %v1468 = vsel %vm1459, %v153, %v484
      %v1469 = vsel %vm1459, %v154, %v486
      %v1470 = vsel %vm1459, %v155, %v488
      %v1471 = vsel %vm1459, %v156, %v490
      %v1472 = vsel %vm1459, %v157, %v492
      %v1473 = vsel %vm1459, %v158, %v494
      %v1474 = vsel %vm1459, %v159, %v496
      %v1475 = vsel %vm1459, %v160, %v498
      %v1476 = vsel %vm1459, %v161, %v500
      %v1477 = vsel %vm1459, %v162, %v502
      %v1478 = vsel %vm1459, %v163, %v504
      %v1479 = vsel %vm1459, %v164, %v506
      %v1480 = vsel %vm1459, %v165, %v508
      %v1481 = vsel %vm1459, %v166, %v510
      %v1482 = vsel %vm1459, %v167, %v512
      %v1483 = vsel %vm1459, %v168, %v514
      %v1484 = vsel %vm1459, %v169, %v516
      %v1485 = vsel %vm1459, %v170, %v518
      %v1486 = vsel %vm1459, %v171, %v520
      %v1487 = vsel %vm1459, %v172, %v522
      %v1488 = vsel %vm1459, %v173, %v524
      %v1489 = vsel %vm1459, %v174, %v526
      %v1490 = vsel %vm1459, %v175, %v528
      %v1491 = vsel %vm1459, %v176, %v530
      %vm1492 = vcmask 64512
      %v1493 = vsel %vm1492, %v1460, %v596
      %v1494 = vsel %vm1492, %v1461, %v598
      %v1495 = vsel %vm1492, %v1462, %v600
      %v1496 = vsel %vm1492, %v1463, %v602
      %v1497 = vsel %vm1492, %v1464, %v604
      %v1498 = vsel %vm1492, %v1465, %v606
      %v1499 = vsel %vm1492, %v1466, %v608
      %v1500 = vsel %vm1492, %v1467, %v610
      %v1501 = vsel %vm1492, %v1468, %v612
      %v1502 = vsel %vm1492, %v1469, %v614
      %v1503 = vsel %vm1492, %v1470, %v616
      %v1504 = vsel %vm1492, %v1471, %v618
      %v1505 = vsel %vm1492, %v1472, %v620
      %v1506 = vsel %vm1492, %v1473, %v622
      %v1507 = vsel %vm1492, %v1474, %v624
      %v1508 = vsel %vm1492, %v1475, %v626
      %v1509 = vsel %vm1492, %v1476, %v628
      %v1510 = vsel %vm1492, %v1477, %v630
      %v1511 = vsel %vm1492, %v1478, %v632
      %v1512 = vsel %vm1492, %v1479, %v634
      %v1513 = vsel %vm1492, %v1480, %v636
      %v1514 = vsel %vm1492, %v1481, %v638
      %v1515 = vsel %vm1492, %v1482, %v640
      %v1516 = vsel %vm1492, %v1483, %v642
      %v1517 = vsel %vm1492, %v1484, %v644
      %v1518 = vsel %vm1492, %v1485, %v646
      %v1519 = vsel %vm1492, %v1486, %v648
      %v1520 = vsel %vm1492, %v1487, %v650
      %v1521 = vsel %vm1492, %v1488, %v652
      %v1522 = vsel %vm1492, %v1489, %v654
      %v1523 = vsel %vm1492, %v1490, %v656
      %v1524 = vsel %vm1492, %v1491, %v658
      %vm1525 = vcmask 97280
      %v1526 = vsel %vm1525, %v1493, %v724
      %v1527 = vsel %vm1525, %v1494, %v726
      %v1528 = vsel %vm1525, %v1495, %v728
      %v1529 = vsel %vm1525, %v1496, %v730
      %v1530 = vsel %vm1525, %v1497, %v732
      %v1531 = vsel %vm1525, %v1498, %v734
      %v1532 = vsel %vm1525, %v1499, %v736
      %v1533 = vsel %vm1525, %v1500, %v738
      %v1534 = vsel %vm1525, %v1501, %v740
      %v1535 = vsel %vm1525, %v1502, %v742
      %v1536 = vsel %vm1525, %v1503, %v744
      %v1537 = vsel %vm1525, %v1504, %v746
      %v1538 = vsel %vm1525, %v1505, %v748
      %v1539 = vsel %vm1525, %v1506, %v750
      %v1540 = vsel %vm1525, %v1507, %v752
      %v1541 = vsel %vm1525, %v1508, %v754
      %v1542 = vsel %vm1525, %v1509, %v756
      %v1543 = vsel %vm1525, %v1510, %v758
      %v1544 = vsel %vm1525, %v1511, %v760
      %v1545 = vsel %vm1525, %v1512, %v762
      %v1546 = vsel %vm1525, %v1513, %v764
      %v1547 = vsel %vm1525, %v1514, %v766
      %v1548 = vsel %vm1525, %v1515, %v768
      %v1549 = vsel %vm1525, %v1516, %v770
      %v1550 = vsel %vm1525, %v1517, %v772
      %v1551 = vsel %vm1525, %v1518, %v774
      %v1552 = vsel %vm1525, %v1519, %v776
      %v1553 = vsel %vm1525, %v1520, %v778
      %v1554 = vsel %vm1525, %v1521, %v780
      %v1555 = vsel %vm1525, %v1522, %v782
      %v1556 = vsel %vm1525, %v1523, %v784
      %v1557 = vsel %vm1525, %v1524, %v786
      %vm1558 = vcmask 130048
      %v1559 = vsel %vm1558, %v1526, %v852
      %v1560 = vsel %vm1558, %v1527, %v854
      %v1561 = vsel %vm1558, %v1528, %v856
      %v1562 = vsel %vm1558, %v1529, %v858
      %v1563 = vsel %vm1558, %v1530, %v860
      %v1564 = vsel %vm1558, %v1531, %v862
      %v1565 = vsel %vm1558, %v1532, %v864
      %v1566 = vsel %vm1558, %v1533, %v866
      %v1567 = vsel %vm1558, %v1534, %v868
      %v1568 = vsel %vm1558, %v1535, %v870
      %v1569 = vsel %vm1558, %v1536, %v872
      %v1570 = vsel %vm1558, %v1537, %v874
      %v1571 = vsel %vm1558, %v1538, %v876
      %v1572 = vsel %vm1558, %v1539, %v878
      %v1573 = vsel %vm1558, %v1540, %v880
      %v1574 = vsel %vm1558, %v1541, %v882
      %v1575 = vsel %vm1558, %v1542, %v884
      %v1576 = vsel %vm1558, %v1543, %v886
      %v1577 = vsel %vm1558, %v1544, %v888
      %v1578 = vsel %vm1558, %v1545, %v890
      %v1579 = vsel %vm1558, %v1546, %v892
      %v1580 = vsel %vm1558, %v1547, %v894
      %v1581 = vsel %vm1558, %v1548, %v896
      %v1582 = vsel %vm1558, %v1549, %v898
      %v1583 = vsel %vm1558, %v1550, %v900
      %v1584 = vsel %vm1558, %v1551, %v902
      %v1585 = vsel %vm1558, %v1552, %v904
      %v1586 = vsel %vm1558, %v1553, %v906
      %v1587 = vsel %vm1558, %v1554, %v908
      %v1588 = vsel %vm1558, %v1555, %v910
      %v1589 = vsel %vm1558, %v1556, %v912
      %v1590 = vsel %vm1558, %v1557, %v914
      %vm1591 = vcmask 162816
      %v1592 = vsel %vm1591, %v1559, %v980
      %v1593 = vsel %vm1591, %v1560, %v982
      %v1594 = vsel %vm1591, %v1561, %v984
      %v1595 = vsel %vm1591, %v1562, %v986
      %v1596 = vsel %vm1591, %v1563, %v988
      %v1597 = vsel %vm1591, %v1564, %v990
      %v1598 = vsel %vm1591, %v1565, %v992
      %v1599 = vsel %vm1591, %v1566, %v994
      %v1600 = vsel %vm1591, %v1567, %v996
      %v1601 = vsel %vm1591, %v1568, %v998
      %v1602 = vsel %vm1591, %v1569, %v1000
      %v1603 = vsel %vm1591, %v1570, %v1002
      %v1604 = vsel %vm1591, %v1571, %v1004
      %v1605 = vsel %vm1591, %v1572, %v1006
      %v1606 = vsel %vm1591, %v1573, %v1008
      %v1607 = vsel %vm1591, %v1574, %v1010
      %v1608 = vsel %vm1591, %v1575, %v1012
      %v1609 = vsel %vm1591, %v1576, %v1014
      %v1610 = vsel %vm1591, %v1577, %v1016
      %v1611 = vsel %vm1591, %v1578, %v1018
      %v1612 = vsel %vm1591, %v1579, %v1020
      %v1613 = vsel %vm1591, %v1580, %v1022
      %v1614 = vsel %vm1591, %v1581, %v1024
      %v1615 = vsel %vm1591, %v1582, %v1026
      %v1616 = vsel %vm1591, %v1583, %v1028
      %v1617 = vsel %vm1591, %v1584, %v1030
      %v1618 = vsel %vm1591, %v1585, %v1032
      %v1619 = vsel %vm1591, %v1586, %v1034
      %v1620 = vsel %vm1591, %v1587, %v1036
      %v1621 = vsel %vm1591, %v1588, %v1038
      %v1622 = vsel %vm1591, %v1589, %v1040
      %v1623 = vsel %vm1591, %v1590, %v1042
      %vm1624 = vcmask 195584
      %v1625 = vsel %vm1624, %v1592, %v1108
      %v1626 = vsel %vm1624, %v1593, %v1110
      %v1627 = vsel %vm1624, %v1594, %v1112
      %v1628 = vsel %vm1624, %v1595, %v1114
      %v1629 = vsel %vm1624, %v1596, %v1116
      %v1630 = vsel %vm1624, %v1597, %v1118
      %v1631 = vsel %vm1624, %v1598, %v1120
      %v1632 = vsel %vm1624, %v1599, %v1122
      %v1633 = vsel %vm1624, %v1600, %v1124
      %v1634 = vsel %vm1624, %v1601, %v1126
      %v1635 = vsel %vm1624, %v1602, %v1128
      %v1636 = vsel %vm1624, %v1603, %v1130
      %v1637 = vsel %vm1624, %v1604, %v1132
      %v1638 = vsel %vm1624, %v1605, %v1134
      %v1639 = vsel %vm1624, %v1606, %v1136
      %v1640 = vsel %vm1624, %v1607, %v1138
      %v1641 = vsel %vm1624, %v1608, %v1140
      %v1642 = vsel %vm1624, %v1609, %v1142
      %v1643 = vsel %vm1624, %v1610, %v1144
      %v1644 = vsel %vm1624, %v1611, %v1146
      %v1645 = vsel %vm1624, %v1612, %v1148
      %v1646 = vsel %vm1624, %v1613, %v1150
      %v1647 = vsel %vm1624, %v1614, %v1152
      %v1648 = vsel %vm1624, %v1615, %v1154
      %v1649 = vsel %vm1624, %v1616, %v1156
      %v1650 = vsel %vm1624, %v1617, %v1158
      %v1651 = vsel %vm1624, %v1618, %v1160
      %v1652 = vsel %vm1624, %v1619, %v1162
      %v1653 = vsel %vm1624, %v1620, %v1164
      %v1654 = vsel %vm1624, %v1621, %v1166
      %v1655 = vsel %vm1624, %v1622, %v1168
      %v1656 = vsel %vm1624, %v1623, %v1170
      %vm1657 = vcmask 228352
      %v1658 = vsel %vm1657, %v1625, %v1236
      %v1659 = vsel %vm1657, %v1626, %v1238
      %v1660 = vsel %vm1657, %v1627, %v1240
      %v1661 = vsel %vm1657, %v1628, %v1242
      %v1662 = vsel %vm1657, %v1629, %v1244
      %v1663 = vsel %vm1657, %v1630, %v1246
      %v1664 = vsel %vm1657, %v1631, %v1248
      %v1665 = vsel %vm1657, %v1632, %v1250
      %v1666 = vsel %vm1657, %v1633, %v1252
      %v1667 = vsel %vm1657, %v1634, %v1254
      %v1668 = vsel %vm1657, %v1635, %v1256
      %v1669 = vsel %vm1657, %v1636, %v1258
      %v1670 = vsel %vm1657, %v1637, %v1260
      %v1671 = vsel %vm1657, %v1638, %v1262
      %v1672 = vsel %vm1657, %v1639, %v1264
      %v1673 = vsel %vm1657, %v1640, %v1266
      %v1674 = vsel %vm1657, %v1641, %v1268
      %v1675 = vsel %vm1657, %v1642, %v1270
      %v1676 = vsel %vm1657, %v1643, %v1272
      %v1677 = vsel %vm1657, %v1644, %v1274
      %v1678 = vsel %vm1657, %v1645, %v1276
      %v1679 = vsel %vm1657, %v1646, %v1278
      %v1680 = vsel %vm1657, %v1647, %v1280
      %v1681 = vsel %vm1657, %v1648, %v1282
      %v1682 = vsel %vm1657, %v1649, %v1284
      %v1683 = vsel %vm1657, %v1650, %v1286
      %v1684 = vsel %vm1657, %v1651, %v1288
      %v1685 = vsel %vm1657, %v1652, %v1290
      %v1686 = vsel %vm1657, %v1653, %v1292
      %v1687 = vsel %vm1657, %v1654, %v1294
      %v1688 = vsel %vm1657, %v1655, %v1296
      %v1689 = vsel %vm1657, %v1656, %v1298
      %vm1690 = vcmask 261120
      %v1691 = vsel %vm1690, %v1658, %v1364
      %v1692 = vsel %vm1690, %v1659, %v1366
      %v1693 = vsel %vm1690, %v1660, %v1368
      %v1694 = vsel %vm1690, %v1661, %v1370
      %v1695 = vsel %vm1690, %v1662, %v1372
      %v1696 = vsel %vm1690, %v1663, %v1374
      %v1697 = vsel %vm1690, %v1664, %v1376
      %v1698 = vsel %vm1690, %v1665, %v1378
      %v1699 = vsel %vm1690, %v1666, %v1380
      %v1700 = vsel %vm1690, %v1667, %v1382
      %v1701 = vsel %vm1690, %v1668, %v1384
      %v1702 = vsel %vm1690, %v1669, %v1386
      %v1703 = vsel %vm1690, %v1670, %v1388
      %v1704 = vsel %vm1690, %v1671, %v1390
      %v1705 = vsel %vm1690, %v1672, %v1392
      %v1706 = vsel %vm1690, %v1673, %v1394
      %v1707 = vsel %vm1690, %v1674, %v1396
      %v1708 = vsel %vm1690, %v1675, %v1398
      %v1709 = vsel %vm1690, %v1676, %v1400
      %v1710 = vsel %vm1690, %v1677, %v1402
      %v1711 = vsel %vm1690, %v1678, %v1404
      %v1712 = vsel %vm1690, %v1679, %v1406
      %v1713 = vsel %vm1690, %v1680, %v1408
      %v1714 = vsel %vm1690, %v1681, %v1410
      %v1715 = vsel %vm1690, %v1682, %v1412
      %v1716 = vsel %vm1690, %v1683, %v1414
      %v1717 = vsel %vm1690, %v1684, %v1416
      %v1718 = vsel %vm1690, %v1685, %v1418
      %v1719 = vsel %vm1690, %v1686, %v1420
      %v1720 = vsel %vm1690, %v1687, %v1422
      %v1721 = vsel %vm1690, %v1688, %v1424
      %v1722 = vsel %vm1690, %v1689, %v1426
      %v1723 = vld [vmem:[%s1] sm:$0xff]
      %v1724 = vld [vmem:[%s1 + $0x8] sm:$0xff]
      %v1725 = vld [vmem:[%s1 + $0x10] sm:$0xff]
      %v1726 = vld [vmem:[%s1 + $0x18] sm:$0xff]
      %v1727 = vld [vmem:[%s1 + $0x20] sm:$0xf]
      %vm1728 = vcmask 293888
      %v1730 = vsel %vm1728, %v1691, 0
      %v1733 = vsel %vm1728, %v1692, 0
      %v1736 = vsel %vm1728, %v1693, 0
      %v1739 = vsel %vm1728, %v1694, 0
      %v1742 = vsel %vm1728, %v1695, 0
      %v1745 = vsel %vm1728, %v1696, 0
      %v1748 = vsel %vm1728, %v1697, 0
      %v1751 = vsel %vm1728, %v1698, 0
      %v1754 = vsel %vm1728, %v1699, 0
      %v1757 = vsel %vm1728, %v1700, 0
      %v1760 = vsel %vm1728, %v1701, 0
      %v1763 = vsel %vm1728, %v1702, 0
      %v1766 = vsel %vm1728, %v1703, 0
      %v1769 = vsel %vm1728, %v1704, 0
      %v1772 = vsel %vm1728, %v1705, 0
      %v1775 = vsel %vm1728, %v1706, 0
      %v1778 = vsel %vm1728, %v1707, 0
      %v1781 = vsel %vm1728, %v1708, 0
      %v1784 = vsel %vm1728, %v1709, 0
      %v1787 = vsel %vm1728, %v1710, 0
      %v1790 = vsel %vm1728, %v1711, 0
      %v1793 = vsel %vm1728, %v1712, 0
      %v1796 = vsel %vm1728, %v1713, 0
      %v1799 = vsel %vm1728, %v1714, 0
      %v1802 = vsel %vm1728, %v1715, 0
      %v1805 = vsel %vm1728, %v1716, 0
      %v1808 = vsel %vm1728, %v1717, 0
      %v1811 = vsel %vm1728, %v1718, 0
      %v1814 = vsel %vm1728, %v1719, 0
      %v1817 = vsel %vm1728, %v1720, 0
      %v1820 = vsel %vm1728, %v1721, 0
      %v1823 = vsel %vm1728, %v1722, 0
      %vm1825 = vcmask 1043456
      %v1827 = vsel %vm1825, %v1727, 0
      %1829 = vmatprep.subr.mxu0 0.0
      %1830 = vmatpush1.msra.mxu0 %v1723
      %1831 = vmatprep.subr.mxu0 0.0
      %1832 = vmatpush1.msra.mxu0 %v1724
      %1833 = vmatprep.subr.mxu0 0.0
      %1834 = vmatpush1.msra.mxu0 %v1725
      %1835 = vmatprep.subr.mxu0 0.0
      %1836 = vmatpush1.msra.mxu0 %v1726
      %1837 = vmatprep.subr.mxu0 0.0
      %1838 = vmatpush1.msra.mxu0 %v1827
      %1839 = vmatprep.subr.mxu0 0.0
      %1840 = vmatpush1.msra.mxu0 0.0
      %1841 = vmatprep.subr.mxu0 0.0
      %1842 = vmatpush1.msra.mxu0 0.0
      %1843 = vmatprep.subr.mxu0 0.0
      %1844 = vmatpush1.msra.mxu0 0.0
      %1845 = vmatprep.subr.mxu0 0.0
      %1846 = vmatpush1.msra.mxu0 0.0
      %1847 = vmatprep.subr.mxu0 0.0
      %1848 = vmatpush1.msra.mxu0 0.0
      %1849 = vmatprep.subr.mxu0 0.0
      %1850 = vmatpush1.msra.mxu0 0.0
      %1851 = vmatprep.subr.mxu0 0.0
      %1852 = vmatpush1.msra.mxu0 0.0
      %1853 = vmatprep.subr.mxu0 0.0
      %1854 = vmatpush1.msra.mxu0 0.0
      %1855 = vmatprep.subr.mxu0 0.0
      %1856 = vmatpush1.msra.mxu0 0.0
      %1857 = vmatprep.subr.mxu0 0.0
      %1858 = vmatpush1.msra.mxu0 0.0
      %1859 = vmatprep.subr.mxu0 0.0
      %1860 = vmatpush1.msra.mxu0 0.0
      %1861 = vmatprep.subr.mxu0 0.0
      %1862 = vmatpush1.msra.mxu0 0.0
      %1863 = vmatprep.subr.mxu0 0.0
      %1864 = vmatpush1.msra.mxu0 0.0
      %1865 = vmatprep.subr.mxu0 0.0
      %1866 = vmatpush1.msra.mxu0 0.0
      %1867 = vmatprep.subr.mxu0 0.0
      %1868 = vmatpush1.msra.mxu0 0.0
      %1869 = vmatprep.subr.mxu0 0.0
      %1870 = vmatpush1.msra.mxu0 0.0
      %1871 = vmatprep.subr.mxu0 0.0
      %1872 = vmatpush1.msra.mxu0 0.0
      %1873 = vmatprep.subr.mxu0 0.0
      %1874 = vmatpush1.msra.mxu0 0.0
      %1875 = vmatprep.subr.mxu0 0.0
      %1876 = vmatpush1.msra.mxu0 0.0
      %1877 = vmatprep.subr.mxu0 0.0
      %1878 = vmatpush1.msra.mxu0 0.0
      %1879 = vmatprep.subr.mxu0 0.0
      %1880 = vmatpush1.msra.mxu0 0.0
      %1881 = vmatprep.subr.mxu0 0.0
      %1882 = vmatpush1.msra.mxu0 0.0
      %1883 = vmatprep.subr.mxu0 0.0
      %1884 = vmatpush1.msra.mxu0 0.0
      %1885 = vmatprep.subr.mxu0 0.0
      %1886 = vmatpush1.msra.mxu0 0.0
      %1887 = vmatprep.subr.mxu0 0.0
      %1888 = vmatpush1.msra.mxu0 0.0
      %1889 = vmatprep.subr.mxu0 0.0
      %1890 = vmatpush1.msra.mxu0 0.0
      %1891 = vmatprep.subr.mxu0 0.0
      %1892 = vmatpush1.msra.mxu0 0.0
      %1893 = vmatprep.mubr.f32.mxu0 0.0
      %1894 = vmatmul.mubr.f32.gmra.mrb[0].mxu0 %v1730
      %v1895 = vpop.f32.mrb[0].mxu0
      %v1896 = vadd.f32 0.0, %v1895
      %v1897 = vpop.f32.mrb[0].mxu0
      %1898 = vmatprep.mubr.f32.mxu0 0.0
      %1899 = vmatmul.mubr.f32.gmra.mrb[0].mxu0 %v1733
      %v1900 = vpop.f32.mrb[0].mxu0
      %v1901 = vadd.f32 0.0, %v1900
      %v1902 = vpop.f32.mrb[0].mxu0
      %1903 = vmatprep.mubr.f32.mxu0 0.0
      %1904 = vmatmul.mubr.f32.gmra.mrb[0].mxu0 %v1736
      %v1905 = vpop.f32.mrb[0].mxu0
      %v1906 = vadd.f32 0.0, %v1905
      %v1907 = vpop.f32.mrb[0].mxu0
      %1908 = vmatprep.mubr.f32.mxu0 0.0
      %1909 = vmatmul.mubr.f32.gmra.mrb[0].mxu0 %v1739
      %v1910 = vpop.f32.mrb[0].mxu0
      %v1911 = vadd.f32 0.0, %v1910
      %v1912 = vpop.f32.mrb[0].mxu0
      %1913 = vmatprep.mubr.f32.mxu0 0.0
      %1914 = vmatmul.mubr.f32.gmra.mrb[0].mxu0 %v1742
      %v1915 = vpop.f32.mrb[0].mxu0
      %v1916 = vadd.f32 0.0, %v1915
      %v1917 = vpop.f32.mrb[0].mxu0
      %1918 = vmatprep.mubr.f32.mxu0 0.0
      %1919 = vmatmul.mubr.f32.gmra.mrb[0].mxu0 %v1745
      %v1920 = vpop.f32.mrb[0].mxu0
      %v1921 = vadd.f32 0.0, %v1920
      %v1922 = vpop.f32.mrb[0].mxu0
      %1923 = vmatprep.mubr.f32.mxu0 0.0
      %1924 = vmatmul.mubr.f32.gmra.mrb[0].mxu0 %v1748
      %v1925 = vpop.f32.mrb[0].mxu0
      %v1926 = vadd.f32 0.0, %v1925
      %v1927 = vpop.f32.mrb[0].mxu0
      %1928 = vmatprep.mubr.f32.mxu0 0.0
      %1929 = vmatmul.mubr.f32.gmra.mrb[0].mxu0 %v1751
      %v1930 = vpop.f32.mrb[0].mxu0
      %v1931 = vadd.f32 0.0, %v1930
      %v1932 = vpop.f32.mrb[0].mxu0
      %1933 = vmatprep.mubr.f32.mxu0 0.0
      %1934 = vmatmul.mubr.f32.gmra.mrb[0].mxu0 %v1754
      %v1935 = vpop.f32.mrb[0].mxu0
      %v1936 = vadd.f32 0.0, %v1935
      %v1937 = vpop.f32.mrb[0].mxu0
      %1938 = vmatprep.mubr.f32.mxu0 0.0
      %1939 = vmatmul.mubr.f32.gmra.mrb[0].mxu0 %v1757
      %v1940 = vpop.f32.mrb[0].mxu0
      %v1941 = vadd.f32 0.0, %v1940
      %v1942 = vpop.f32.mrb[0].mxu0
      %1943 = vmatprep.mubr.f32.mxu0 0.0
      %1944 = vmatmul.mubr.f32.gmra.mrb[0].mxu0 %v1760
      %v1945 = vpop.f32.mrb[0].mxu0
      %v1946 = vadd.f32 0.0, %v1945
      %v1947 = vpop.f32.mrb[0].mxu0
      %1948 = vmatprep.mubr.f32.mxu0 0.0
      %1949 = vmatmul.mubr.f32.gmra.mrb[0].mxu0 %v1763
      %v1950 = vpop.f32.mrb[0].mxu0
      %v1951 = vadd.f32 0.0, %v1950
      %v1952 = vpop.f32.mrb[0].mxu0
      %1953 = vmatprep.mubr.f32.mxu0 0.0
      %1954 = vmatmul.mubr.f32.gmra.mrb[0].mxu0 %v1766
      %v1955 = vpop.f32.mrb[0].mxu0
      %v1956 = vadd.f32 0.0, %v1955
      %v1957 = vpop.f32.mrb[0].mxu0
      %1958 = vmatprep.mubr.f32.mxu0 0.0
      %1959 = vmatmul.mubr.f32.gmra.mrb[0].mxu0 %v1769
      %v1960 = vpop.f32.mrb[0].mxu0
      %v1961 = vadd.f32 0.0, %v1960
      %v1962 = vpop.f32.mrb[0].mxu0
      %1963 = vmatprep.mubr.f32.mxu0 0.0
      %1964 = vmatmul.mubr.f32.gmra.mrb[0].mxu0 %v1772
      %v1965 = vpop.f32.mrb[0].mxu0
      %v1966 = vadd.f32 0.0, %v1965
      %v1967 = vpop.f32.mrb[0].mxu0
      %1968 = vmatprep.mubr.f32.mxu0 0.0
      %1969 = vmatmul.mubr.f32.gmra.mrb[0].mxu0 %v1775
      %v1970 = vpop.f32.mrb[0].mxu0
      %v1971 = vadd.f32 0.0, %v1970
      %v1972 = vpop.f32.mrb[0].mxu0
      %1973 = vmatprep.mubr.f32.mxu0 0.0
      %1974 = vmatmul.mubr.f32.gmra.mrb[0].mxu0 %v1778
      %v1975 = vpop.f32.mrb[0].mxu0
      %v1976 = vadd.f32 0.0, %v1975
      %v1977 = vpop.f32.mrb[0].mxu0
      %1978 = vmatprep.mubr.f32.mxu0 0.0
      %1979 = vmatmul.mubr.f32.gmra.mrb[0].mxu0 %v1781
      %v1980 = vpop.f32.mrb[0].mxu0
      %v1981 = vadd.f32 0.0, %v1980
      %v1982 = vpop.f32.mrb[0].mxu0
      %1983 = vmatprep.mubr.f32.mxu0 0.0
      %1984 = vmatmul.mubr.f32.gmra.mrb[0].mxu0 %v1784
      %v1985 = vpop.f32.mrb[0].mxu0
      %v1986 = vadd.f32 0.0, %v1985
      %v1987 = vpop.f32.mrb[0].mxu0
      %1988 = vmatprep.mubr.f32.mxu0 0.0
      %1989 = vmatmul.mubr.f32.gmra.mrb[0].mxu0 %v1787
      %v1990 = vpop.f32.mrb[0].mxu0
      %v1991 = vadd.f32 0.0, %v1990
      %v1992 = vpop.f32.mrb[0].mxu0
      %1993 = vmatprep.mubr.f32.mxu0 0.0
      %1994 = vmatmul.mubr.f32.gmra.mrb[0].mxu0 %v1790
      %v1995 = vpop.f32.mrb[0].mxu0
      %v1996 = vadd.f32 0.0, %v1995
      %v1997 = vpop.f32.mrb[0].mxu0
      %1998 = vmatprep.mubr.f32.mxu0 0.0
      %1999 = vmatmul.mubr.f32.gmra.mrb[0].mxu0 %v1793
      %v2000 = vpop.f32.mrb[0].mxu0
      %v2001 = vadd.f32 0.0, %v2000
      %v2002 = vpop.f32.mrb[0].mxu0
      %2003 = vmatprep.mubr.f32.mxu0 0.0
      %2004 = vmatmul.mubr.f32.gmra.mrb[0].mxu0 %v1796
      %v2005 = vpop.f32.mrb[0].mxu0
      %v2006 = vadd.f32 0.0, %v2005
      %v2007 = vpop.f32.mrb[0].mxu0
      %2008 = vmatprep.mubr.f32.mxu0 0.0
      %2009 = vmatmul.mubr.f32.gmra.mrb[0].mxu0 %v1799
      %v2010 = vpop.f32.mrb[0].mxu0
      %v2011 = vadd.f32 0.0, %v2010
      %v2012 = vpop.f32.mrb[0].mxu0
      %2013 = vmatprep.mubr.f32.mxu0 0.0
      %2014 = vmatmul.mubr.f32.gmra.mrb[0].mxu0 %v1802
      %v2015 = vpop.f32.mrb[0].mxu0
      %v2016 = vadd.f32 0.0, %v2015
      %v2017 = vpop.f32.mrb[0].mxu0
      %2018 = vmatprep.mubr.f32.mxu0 0.0
      %2019 = vmatmul.mubr.f32.gmra.mrb[0].mxu0 %v1805
      %v2020 = vpop.f32.mrb[0].mxu0
      %v2021 = vadd.f32 0.0, %v2020
      %v2022 = vpop.f32.mrb[0].mxu0
      %2023 = vmatprep.mubr.f32.mxu0 0.0
      %2024 = vmatmul.mubr.f32.gmra.mrb[0].mxu0 %v1808
      %v2025 = vpop.f32.mrb[0].mxu0
      %v2026 = vadd.f32 0.0, %v2025
      %v2027 = vpop.f32.mrb[0].mxu0
      %2028 = vmatprep.mubr.f32.mxu0 0.0
      %2029 = vmatmul.mubr.f32.gmra.mrb[0].mxu0 %v1811
      %v2030 = vpop.f32.mrb[0].mxu0
      %v2031 = vadd.f32 0.0, %v2030
      %v2032 = vpop.f32.mrb[0].mxu0
      %2033 = vmatprep.mubr.f32.mxu0 0.0
      %2034 = vmatmul.mubr.f32.gmra.mrb[0].mxu0 %v1814
      %v2035 = vpop.f32.mrb[0].mxu0
      %v2036 = vadd.f32 0.0, %v2035
      %v2037 = vpop.f32.mrb[0].mxu0
      %2038 = vmatprep.mubr.f32.mxu0 0.0
      %2039 = vmatmul.mubr.f32.gmra.mrb[0].mxu0 %v1817
      %v2040 = vpop.f32.mrb[0].mxu0
      %v2041 = vadd.f32 0.0, %v2040
      %v2042 = vpop.f32.mrb[0].mxu0
      %2043 = vmatprep.mubr.f32.mxu0 0.0
      %2044 = vmatmul.mubr.f32.gmra.mrb[0].mxu0 %v1820
      %v2045 = vpop.f32.mrb[0].mxu0
      %v2046 = vadd.f32 0.0, %v2045
      %v2047 = vpop.f32.mrb[0].mxu0
      %2048 = vmatprep.mubr.f32.mxu0 0.0
      %2049 = vmatmul.mubr.f32.gmra.mrb[0].mxu0 %v1823
      %v2050 = vpop.f32.mrb[0].mxu0
      %v2051 = vadd.f32 0.0, %v2050
      %v2052 = vpop.f32.mrb[0].mxu0
      %2053 = vdwg.mxu0
      %2054 = vst.msk [vmem:[%s143] sm:$0xff] %vm1492, %v1896
      %2055 = vst.msk [vmem:[%s143 + $0x8] sm:$0xff] %vm1492, %v1901
      %2056 = vst.msk [vmem:[%s143 + $0x10] sm:$0xff] %vm1492, %v1906
      %2057 = vst.msk [vmem:[%s143 + $0x18] sm:$0xff] %vm1492, %v1911
      %2058 = vst.msk [vmem:[%s143 + $0x20] sm:$0xff] %vm1492, %v1916
      %2059 = vst.msk [vmem:[%s143 + $0x28] sm:$0xff] %vm1492, %v1921
      %2060 = vst.msk [vmem:[%s143 + $0x30] sm:$0xff] %vm1492, %v1926
      %2061 = vst.msk [vmem:[%s143 + $0x38] sm:$0xff] %vm1492, %v1931
      %2062 = vst.msk [vmem:[%s143 + $0x40] sm:$0xff] %vm1492, %v1936
      %2063 = vst.msk [vmem:[%s143 + $0x48] sm:$0xff] %vm1492, %v1941
      %2064 = vst.msk [vmem:[%s143 + $0x50] sm:$0xff] %vm1492, %v1946
      %2065 = vst.msk [vmem:[%s143 + $0x58] sm:$0xff] %vm1492, %v1951
      %2066 = vst.msk [vmem:[%s143 + $0x60] sm:$0xff] %vm1492, %v1956
      %2067 = vst.msk [vmem:[%s143 + $0x68] sm:$0xff] %vm1492, %v1961
      %2068 = vst.msk [vmem:[%s143 + $0x70] sm:$0xff] %vm1492, %v1966
      %2069 = vst.msk [vmem:[%s143 + $0x78] sm:$0xff] %vm1492, %v1971
      %2070 = vst.msk [vmem:[%s143 + $0x80] sm:$0xff] %vm1492, %v1976
      %2071 = vst.msk [vmem:[%s143 + $0x88] sm:$0xff] %vm1492, %v1981
      %2072 = vst.msk [vmem:[%s143 + $0x90] sm:$0xff] %vm1492, %v1986
      %2073 = vst.msk [vmem:[%s143 + $0x98] sm:$0xff] %vm1492, %v1991
      %2074 = vst.msk [vmem:[%s143 + $0xa0] sm:$0xff] %vm1492, %v1996
      %2075 = vst.msk [vmem:[%s143 + $0xa8] sm:$0xff] %vm1492, %v2001
      %2076 = vst.msk [vmem:[%s143 + $0xb0] sm:$0xff] %vm1492, %v2006
      %2077 = vst.msk [vmem:[%s143 + $0xb8] sm:$0xff] %vm1492, %v2011
      %2078 = vst.msk [vmem:[%s143 + $0xc0] sm:$0xff] %vm1492, %v2016
      %2079 = vst.msk [vmem:[%s143 + $0xc8] sm:$0xff] %vm1492, %v2021
      %2080 = vst.msk [vmem:[%s143 + $0xd0] sm:$0xff] %vm1492, %v2026
      %2081 = vst.msk [vmem:[%s143 + $0xd8] sm:$0xff] %vm1492, %v2031
      %2082 = vst.msk [vmem:[%s143 + $0xe0] sm:$0xff] %vm1492, %v2036
      %2083 = vst.msk [vmem:[%s143 + $0xe8] sm:$0xff] %vm1492, %v2041
      %2084 = vst.msk [vmem:[%s143 + $0xf0] sm:$0xff] %vm1492, %v2046
      %2085 = vst.msk [vmem:[%s143 + $0xf8] sm:$0xff] %vm1492, %v2051
      %s2086 = smul.u32 32, %s13
      %p2087 = scmp.lt.s32.totalorder %s2086, 63
      %s2088 = scalar_select %p2087, %s2086, 63
      %s2089 = smul.addr %s2088, 8
      %s2090 = scalar_lea.vmem %s2, %s2089
      // Predicated region
      $region29: #{tpu_custom_call.1} parent=27 // pred_check
        %p2091 = pneg %p78
      $region30: #{tpu_custom_call.1} parent=27 // pred_check_branch
        %2093 = sbr.rel (%p2091) target = $region32
      $region31: #{tpu_custom_call.1} parent=27 // pred_region
        %s2094 = smul.u32 32, %s13
      $region32: #{tpu_custom_call.1} parent=27 // pred_fallthru
        _
    $region28: #{tpu_custom_call.1} parent=5 // pred_fallthru
      _
    %p2095 = scmp.le.s32.totalorder 2, %s8
    // Predicated region
    $region33: #{tpu_custom_call.1} parent=5 // pred_check
      %p2096 = pneg %p2095
    $region34: #{tpu_custom_call.1} parent=5 // pred_check_branch
      %2098 = sbr.rel (%p2096) target = $region36
    $region35: #{tpu_custom_call.1} parent=5 // pred_region
      %s2099 = ssub.s32 %s8, 2
      // Predicated region
      $region37: #{tpu_custom_call.1} parent=35 // pred_check
        %p2100 = pneg %p84
      $region38: #{tpu_custom_call.1} parent=35 // pred_check_branch
        %2102 = sbr.rel (%p2100) target = $region40
      $region39: #{tpu_custom_call.1} parent=35 // pred_region
        %s2103 = smul.u32 32, %s14
        %p2104 = scmp.lt.s32.totalorder %s2103, 63
        %s2105 = scalar_select %p2104, %s2103, 63
        %s2106 = smul.addr %s2105, 8
        %s2107 = scalar_lea.vmem %s2, %s2106
      $region40: #{tpu_custom_call.1} parent=35 // pred_fallthru
        _
    $region36: #{tpu_custom_call.1} parent=5 // pred_fallthru
      _
  $region6: #{tpu_custom_call.1} parent=0 // loop_footer
    %s12 = sadd.s32 1, %s8
  $region7: #{tpu_custom_call.1} parent=0 // loop_footer_branch
    %7 = sbr.rel target = $region3
  $region8: #{tpu_custom_call.1} parent=0 // loop_exit
    _

</llo_original>
